<compile_context>
chip_gen: v7x
topology: tpu7x:2x2x1
jax: 0.10.0
libtpu: 0.0.40
codegen_flags: <defaults>
</compile_context>

<pallas_src>
import jax
import jax.numpy as jnp
from jax.experimental import pallas as pl
from jax.experimental.pallas import tpu as pltpu
from jax.scipy.linalg import block_diag


def _siren_kernel(x_ref, w1, b1, w2, b2, w3, b3, wf, bf, o_ref):
    """Fused SIREN on one row tile: 3 sine layers + final linear + sigmoid.

    Sine-layer weights/biases arrive pre-scaled by w0; all weights are bf16 so
    every jnp.dot is a single-pass MXU matmul with f32 accumulation.
    """
    h = jnp.sin(jnp.dot(x_ref[...], w1[...],
                        preferred_element_type=jnp.float32) + b1[...])
    h = jnp.sin(jnp.dot(h.astype(jnp.bfloat16), w2[...],
                        preferred_element_type=jnp.float32) + b2[...])
    h = jnp.sin(jnp.dot(h.astype(jnp.bfloat16), w3[...],
                        preferred_element_type=jnp.float32) + b3[...])
    y = jnp.dot(h.astype(jnp.bfloat16), wf[...],
                preferred_element_type=jnp.float32) + bf[...]
    o_ref[...] = jax.nn.sigmoid(y).astype(o_ref.dtype)


def _round_up(a, b):
    return ((a + b - 1) // b) * b


def _default_lane_pack():
    """256-wide packing on 256x256-MXU generations (v6e/v7x), 128-wide otherwise."""
    try:
        kind = jax.devices()[0].device_kind.lower()
    except Exception:
        return 4
    return 8 if ("v6" in kind or "v7" in kind) else 4


def siren_forward(x, params, *, w0=30.0, tile_m=2048, lane_pack=None):
    """x: [N, d_in] float32. params: list of (W[in,out], b[1,out]) tuples."""
    (w1, b1), (w2, b2), (w3, b3), (wf, bf) = params
    n, d_in = x.shape
    d_hidden = w1.shape[1]
    d_out = wf.shape[1]
    k = lane_pack if lane_pack is not None else _default_lane_pack()

    # --- fold w0 into the sine-layer weights/biases (removes in-kernel muls) --
    w0 = float(w0)
    w1s, b1s = w0 * w1, w0 * b1
    w2s, b2s = w0 * w2, w0 * b2
    w3s, b3s = w0 * w3, w0 * b3

    # --- lane packing: k independent row groups share one vreg ----------------
    # Weights become k-way block-diagonal and are pre-cast to bf16 so the MXU
    # runs single-pass; biases stay f32 for the VPU add.
    bd = lambda w: block_diag(*([w] * k)).astype(jnp.bfloat16)
    w1p, w2p, w3p, wfp = bd(w1s), bd(w2s), bd(w3s), bd(wf)
    b1p = jnp.tile(b1s, (1, k)).astype(jnp.float32)
    b2p = jnp.tile(b2s, (1, k)).astype(jnp.float32)
    b3p = jnp.tile(b3s, (1, k)).astype(jnp.float32)
    bfp = jnp.tile(bf, (1, k)).astype(jnp.float32)

    # --- row tiling: pad N so the packed row count divides the tile -----------
    n_pack = -(-n // k)                              # ceil(N / k) packed rows
    tm = min(tile_m, _round_up(n_pack, 8))
    if n_pack > 8:
        # Keep >= 2 grid steps whenever possible so both v7x TensorCores get
        # work; the ~0.35us extra step is negligible.
        tm = min(tm, _round_up(-(-n_pack // 2), 8))
    tm = max(8, _round_up(tm, 8))
    n_pack_pad = _round_up(n_pack, tm)
    n_pad = n_pack_pad * k
    xp = jnp.pad(x.astype(jnp.float32), ((0, n_pad - n), (0, 0)))
    xp = xp.reshape(n_pack_pad, k * d_in).astype(jnp.bfloat16)  # free row-major repack

    kdi, kdh, kdo = k * d_in, k * d_hidden, k * d_out

    cost = pl.CostEstimate(
        flops=2 * n_pack_pad * (kdi * kdh + 2 * kdh * kdh + kdh * kdo),
        transcendentals=n_pack_pad * (3 * kdh + kdo),
        bytes_accessed=(2 * int(xp.size) + 4 * n_pack_pad * kdo
                        + 2 * sum(int(a.size) for a in (w1p, w2p, w3p, wfp))
                        + 4 * sum(int(a.size) for a in (b1p, b2p, b3p, bfp))),
    )

    full = lambda arr: pl.BlockSpec(arr.shape, lambda i: (0, 0))

    out = pl.pallas_call(
        _siren_kernel,
        out_shape=jax.ShapeDtypeStruct((n_pack_pad, kdo), jnp.float32),
        grid_spec=pltpu.PrefetchScalarGridSpec(
            num_scalar_prefetch=0,
            grid=(n_pack_pad // tm,),
            in_specs=[
                pl.BlockSpec((tm, kdi), lambda i: (i, 0)),
                full(w1p), full(b1p),
                full(w2p), full(b2p),
                full(w3p), full(b3p),
                full(wfp), full(bfp),
            ],
            out_specs=pl.BlockSpec((tm, kdo), lambda i: (i, 0)),
        ),
        compiler_params=pltpu.CompilerParams(
            dimension_semantics=("parallel",)),
        cost_estimate=cost,
    )(xp, w1p, b1p, w2p, b2p, w3p, b3p, wfp, bfp)

    return out.reshape(n_pad, d_out)[:n]


def init_siren_params(key, d_in, d_hidden, d_out, num_layers, w0=30.0):
    """Deterministic init mirroring the SIREN init scheme.

    Weights are stored transposed: shape [in_features, out_features].
    Biases use the default nn.Linear init range (+-1/sqrt(in_features)).
    """
    dims = [(d_in, d_hidden)] + [(d_hidden, d_hidden)] * (num_layers - 1) \
           + [(d_hidden, d_out)]
    params = []
    for idx, (fin, fout) in enumerate(dims):
        key, kw, kb = jax.random.split(key, 3)
        if idx == 0:
            bound = 1.0 / fin
        else:
            bound = (6.0 / fin) ** 0.5 / w0
        w = jax.random.uniform(kw, (fin, fout), jnp.float32, -bound, bound)
        b_bound = 1.0 / (fin ** 0.5)
        b = jax.random.uniform(kb, (1, fout), jnp.float32, -b_bound, b_bound)
        params.append((w, b))
    return params


def siren_reference(x, params, w0=30.0):
    h = x
    for (w, b) in params[:-1]:
        h = jnp.sin(w0 * (h @ w + b))
    wf, bf = params[-1]
    return jax.nn.sigmoid(h @ wf + bf)


if __name__ == "__main__":
    key = jax.random.PRNGKey(0)
    d_in, d_hidden, d_out, num_layers = 2, 32, 3, 3
    n = 250          # deliberately not a multiple of the packing/tile: exercises padding
    w0 = 30.0

    kx, kp = jax.random.split(key)
    x = jax.random.uniform(kx, (n, d_in), jnp.float32, -1.0, 1.0)
    params = init_siren_params(kp, d_in, d_hidden, d_out, num_layers, w0)

    out = siren_forward(x, params, w0=w0)
    out = jax.block_until_ready(out)

    ref = siren_reference(x, params, w0)
    assert out.shape == (n, d_out)
    # bf16 MXU operands + the w0=30 sine chain amplify matmul rounding; outputs
    # are sigmoid-bounded, so a 1e-2 absolute tolerance is still a meaningful
    # structural check (packing/transpose bugs show up as O(0.1+) errors).
    assert jnp.allclose(out, ref, atol=1e-2, rtol=1e-2), "mismatch vs reference"

    print("KERNEL_OK")
</pallas_src>

<mosaic_0001>
module attributes {stable_mosaic.version = 11 : i64} {
  func.func @_siren_kernel(%arg0: i32, %arg1: memref<32x8xbf16, #tpu.memory_space<vmem>>, %arg2: memref<8x128xbf16, #tpu.memory_space<vmem>>, %arg3: memref<1x128xf32, #tpu.memory_space<vmem>>, %arg4: memref<128x128xbf16, #tpu.memory_space<vmem>>, %arg5: memref<1x128xf32, #tpu.memory_space<vmem>>, %arg6: memref<128x128xbf16, #tpu.memory_space<vmem>>, %arg7: memref<1x128xf32, #tpu.memory_space<vmem>>, %arg8: memref<128x12xbf16, #tpu.memory_space<vmem>>, %arg9: memref<1x12xf32, #tpu.memory_space<vmem>>, %arg10: memref<32x12xf32, #tpu.memory_space<vmem>>) attributes {dimension_semantics = [#tpu.dimension_semantics<parallel>], iteration_bounds = array<i64: 2>, scalar_prefetch = 0 : i64, scratch_operands = 0 : i64, tpu.core_type = #tpu.core_type<tc>, window_params = [{transform_indices = @transform_0, window_bounds = array<i64: 32, 8>}, {pipeline_mode = #tpu.pipeline_mode<synchronous>, transform_indices = @transform_1, window_bounds = array<i64: 8, 128>}, {pipeline_mode = #tpu.pipeline_mode<synchronous>, transform_indices = @transform_2, window_bounds = array<i64: 1, 128>}, {pipeline_mode = #tpu.pipeline_mode<synchronous>, transform_indices = @transform_3, window_bounds = array<i64: 128, 128>}, {pipeline_mode = #tpu.pipeline_mode<synchronous>, transform_indices = @transform_4, window_bounds = array<i64: 1, 128>}, {pipeline_mode = #tpu.pipeline_mode<synchronous>, transform_indices = @transform_5, window_bounds = array<i64: 128, 128>}, {pipeline_mode = #tpu.pipeline_mode<synchronous>, transform_indices = @transform_6, window_bounds = array<i64: 1, 128>}, {pipeline_mode = #tpu.pipeline_mode<synchronous>, transform_indices = @transform_7, window_bounds = array<i64: 128, 12>}, {pipeline_mode = #tpu.pipeline_mode<synchronous>, transform_indices = @transform_8, window_bounds = array<i64: 1, 12>}, {transform_indices = @transform_9, window_bounds = array<i64: 32, 12>}]} {
    %c0 = arith.constant 0 : index
    %c0_0 = arith.constant 0 : index
    %0 = vector.load %arg1[%c0, %c0_0] : memref<32x8xbf16, #tpu.memory_space<vmem>>, vector<32x8xbf16>
    %c0_1 = arith.constant 0 : index
    %c0_2 = arith.constant 0 : index
    %1 = vector.load %arg2[%c0_1, %c0_2] : memref<8x128xbf16, #tpu.memory_space<vmem>>, vector<8x128xbf16>
    %cst = arith.constant dense<0.000000e+00> : vector<32x128xf32>
    %2 = tpu.matmul %0, %1, %cst {dimension_numbers = #tpu.dot_dimension_numbers<[1], [0], [0], [1], [0, 0, 1, 1], [], []>} : vector<32x8xbf16>, vector<8x128xbf16>, vector<32x128xf32> -> vector<32x128xf32>
    %c0_3 = arith.constant 0 : index
    %c0_4 = arith.constant 0 : index
    %3 = vector.load %arg3[%c0_3, %c0_4] : memref<1x128xf32, #tpu.memory_space<vmem>>, vector<1x128xf32>
    %4 = vector.broadcast %3 : vector<1x128xf32> to vector<32x128xf32>
    %5 = arith.addf %2, %4 : vector<32x128xf32>
    %6 = math.sin %5 : vector<32x128xf32>
    %7 = arith.truncf %6 : vector<32x128xf32> to vector<32x128xbf16>
    %c0_5 = arith.constant 0 : index
    %c0_6 = arith.constant 0 : index
    %8 = vector.load %arg4[%c0_5, %c0_6] : memref<128x128xbf16, #tpu.memory_space<vmem>>, vector<128x128xbf16>
    %cst_7 = arith.constant dense<0.000000e+00> : vector<32x128xf32>
    %9 = tpu.matmul %7, %8, %cst_7 {dimension_numbers = #tpu.dot_dimension_numbers<[1], [0], [0], [1], [0, 0, 1, 1], [], []>} : vector<32x128xbf16>, vector<128x128xbf16>, vector<32x128xf32> -> vector<32x128xf32>
    %c0_8 = arith.constant 0 : index
    %c0_9 = arith.constant 0 : index
    %10 = vector.load %arg5[%c0_8, %c0_9] : memref<1x128xf32, #tpu.memory_space<vmem>>, vector<1x128xf32>
    %11 = vector.broadcast %10 : vector<1x128xf32> to vector<32x128xf32>
    %12 = arith.addf %9, %11 : vector<32x128xf32>
    %13 = math.sin %12 : vector<32x128xf32>
    %14 = arith.truncf %13 : vector<32x128xf32> to vector<32x128xbf16>
    %c0_10 = arith.constant 0 : index
    %c0_11 = arith.constant 0 : index
    %15 = vector.load %arg6[%c0_10, %c0_11] : memref<128x128xbf16, #tpu.memory_space<vmem>>, vector<128x128xbf16>
    %cst_12 = arith.constant dense<0.000000e+00> : vector<32x128xf32>
    %16 = tpu.matmul %14, %15, %cst_12 {dimension_numbers = #tpu.dot_dimension_numbers<[1], [0], [0], [1], [0, 0, 1, 1], [], []>} : vector<32x128xbf16>, vector<128x128xbf16>, vector<32x128xf32> -> vector<32x128xf32>
    %c0_13 = arith.constant 0 : index
    %c0_14 = arith.constant 0 : index
    %17 = vector.load %arg7[%c0_13, %c0_14] : memref<1x128xf32, #tpu.memory_space<vmem>>, vector<1x128xf32>
    %18 = vector.broadcast %17 : vector<1x128xf32> to vector<32x128xf32>
    %19 = arith.addf %16, %18 : vector<32x128xf32>
    %20 = math.sin %19 : vector<32x128xf32>
    %21 = arith.truncf %20 : vector<32x128xf32> to vector<32x128xbf16>
    %c0_15 = arith.constant 0 : index
    %c0_16 = arith.constant 0 : index
    %22 = vector.load %arg8[%c0_15, %c0_16] : memref<128x12xbf16, #tpu.memory_space<vmem>>, vector<128x12xbf16>
    %cst_17 = arith.constant dense<0.000000e+00> : vector<32x12xf32>
    %23 = tpu.matmul %21, %22, %cst_17 {dimension_numbers = #tpu.dot_dimension_numbers<[1], [0], [0], [1], [0, 0, 1, 1], [], []>} : vector<32x128xbf16>, vector<128x12xbf16>, vector<32x12xf32> -> vector<32x12xf32>
    %c0_18 = arith.constant 0 : index
    %c0_19 = arith.constant 0 : index
    %24 = vector.load %arg9[%c0_18, %c0_19] : memref<1x12xf32, #tpu.memory_space<vmem>>, vector<1x12xf32>
    %25 = vector.broadcast %24 : vector<1x12xf32> to vector<32x12xf32>
    %26 = arith.addf %23, %25 : vector<32x12xf32>
    %27 = arith.negf %26 : vector<32x12xf32>
    %28 = math.exp %27 : vector<32x12xf32>
    %cst_20 = arith.constant 1.000000e+00 : f32
    %29 = vector.broadcast %cst_20 : f32 to vector<32x12xf32>
    %30 = arith.addf %29, %28 : vector<32x12xf32>
    %31 = arith.divf %29, %30 : vector<32x12xf32>
    %c0_21 = arith.constant 0 : index
    %c0_22 = arith.constant 0 : index
    %32 = vector.load %arg10[%c0_21, %c0_22] : memref<32x12xf32, #tpu.memory_space<vmem>>, vector<32x12xf32>
    tpu.vector_store %arg10[%c0_21, %c0_22], %31 {strides = array<i32>} : memref<32x12xf32, #tpu.memory_space<vmem>>, vector<32x12xf32>,
    return
  }
  func.func @transform_0(%arg0: i32) -> (i32, i32) {
    %c0_i32 = arith.constant 0 : i32
    %c0_i32_0 = arith.constant 0 : i32
    return %arg0, %c0_i32 : i32, i32
  }
  func.func @transform_1(%arg0: i32) -> (i32, i32) {
    %c0_i32 = arith.constant 0 : i32
    %c0_i32_0 = arith.constant 0 : i32
    %c0_i32_1 = arith.constant 0 : i32
    return %c0_i32, %c0_i32_0 : i32, i32
  }
  func.func @transform_2(%arg0: i32) -> (i32, i32) {
    %c0_i32 = arith.constant 0 : i32
    %c0_i32_0 = arith.constant 0 : i32
    %c0_i32_1 = arith.constant 0 : i32
    return %c0_i32, %c0_i32_0 : i32, i32
  }
  func.func @transform_3(%arg0: i32) -> (i32, i32) {
    %c0_i32 = arith.constant 0 : i32
    %c0_i32_0 = arith.constant 0 : i32
    %c0_i32_1 = arith.constant 0 : i32
    return %c0_i32, %c0_i32_0 : i32, i32
  }
  func.func @transform_4(%arg0: i32) -> (i32, i32) {
    %c0_i32 = arith.constant 0 : i32
    %c0_i32_0 = arith.constant 0 : i32
    %c0_i32_1 = arith.constant 0 : i32
    return %c0_i32, %c0_i32_0 : i32, i32
  }
  func.func @transform_5(%arg0: i32) -> (i32, i32) {
    %c0_i32 = arith.constant 0 : i32
    %c0_i32_0 = arith.constant 0 : i32
    %c0_i32_1 = arith.constant 0 : i32
    return %c0_i32, %c0_i32_0 : i32, i32
  }
  func.func @transform_6(%arg0: i32) -> (i32, i32) {
    %c0_i32 = arith.constant 0 : i32
    %c0_i32_0 = arith.constant 0 : i32
    %c0_i32_1 = arith.constant 0 : i32
    return %c0_i32, %c0_i32_0 : i32, i32
  }
  func.func @transform_7(%arg0: i32) -> (i32, i32) {
    %c0_i32 = arith.constant 0 : i32
    %c0_i32_0 = arith.constant 0 : i32
    %c0_i32_1 = arith.constant 0 : i32
    return %c0_i32, %c0_i32_0 : i32, i32
  }
  func.func @transform_8(%arg0: i32) -> (i32, i32) {
    %c0_i32 = arith.constant 0 : i32
    %c0_i32_0 = arith.constant 0 : i32
    %c0_i32_1 = arith.constant 0 : i32
    return %c0_i32, %c0_i32_0 : i32, i32
  }
  func.func @transform_9(%arg0: i32) -> (i32, i32) {
    %c0_i32 = arith.constant 0 : i32
    %c0_i32_0 = arith.constant 0 : i32
    return %arg0, %c0_i32 : i32, i32
  }
}

</mosaic_0001>

<llo_original>
// kernel: tpu_custom_call.1
$region0: #{tpu_custom_call.1}
  #allocation0 [shape = 'u32[]', space=smem, size = 0x4, offset = 0x4, fixed_abs, tag = 'smem constant byte address 0x4 - core index']
  #allocation1 [shape = 'u32[144,128]{1,0:T(1,128)}', space=vmem, size = 0x12000, scoped, tag = 'internal scratch']
  %s0 = inlined_call_operand.vmem [shape: bf16[64,8], index: 0, kind: input, shape index: {}]
  %s1 = inlined_call_operand.vmem [shape: bf16[8,128], index: 1, kind: input, shape index: {}]
  %s2 = inlined_call_operand.vmem [shape: f32[1,128], index: 2, kind: input, shape index: {}]
  %s3 = inlined_call_operand.vmem [shape: bf16[128,128], index: 3, kind: input, shape index: {}]
  %s4 = inlined_call_operand.vmem [shape: f32[1,128], index: 4, kind: input, shape index: {}]
  %s5 = inlined_call_operand.hbm [shape: bf16[128,128], index: 5, kind: input, shape index: {}]
  %s6 = inlined_call_operand.vmem [shape: f32[1,128], index: 6, kind: input, shape index: {}]
  %s7 = inlined_call_operand.vmem [shape: bf16[128,12], index: 7, kind: input, shape index: {}]
  %s8 = inlined_call_operand.vmem [shape: f32[1,12], index: 8, kind: input, shape index: {}]
  %s9 = inlined_call_operand.vmem [shape: f32[64,12], index: 9, kind: output, shape index: {}]
  %s10 = sld [smem:[#allocation0]]
  $region73: #{tpu_custom_call.1} parent=0
    _
  %s12 = ssub.s32 1, %s10
  %s13 = scalar_select 0, %s12, %s10
  $region1: #{tpu_custom_call.1} parent=0
    #allocation2 [shape = 'u8[32768]{0}', space=vmem, size = 0x8000, scoped, tag = 'input window, operand 5, single buffered']
    #allocation3 [shape = 's32[2]{0}', space=sflag, size = 0x8, scoped, tag = 'scoped memory for tpu_custom_call.1']
    %14 = vsyncpa [#allocation3], 0
    loop: start=0, step=1, limit=4
    $region2: #{tpu_custom_call.1} parent=1 // loop_pre_header
      _
    $region3: #{tpu_custom_call.1} parent=1 // loop_header
      %s16 = sphi 0, %s20
      %p17 = scmp.ge.s32.totalorder %s16, 4
      %s26 = sphi 0, %s28
      %s29 = sphi 0, %s26
      %s30 = sphi 0, %s29
      %s46 = sphi 0, %s30
      %s50 = sphi 0, %s50
      %s52 = sphi 0, %s50
      %s53 = sphi 0, %s52
      %s67 = sphi 0, %s53
      %s71 = sphi 0, %s71
      %s73 = sphi 0, %s71
      %s74 = sphi 0, %s73
      %s88 = sphi 0, %s74
      %s92 = sphi 0, %s92
      %s94 = sphi 0, %s92
      %s95 = sphi 0, %s94
      %s109 = sphi 0, %s95
      %s113 = sphi 0, %s113
      %s115 = sphi 0, %s113
      %s116 = sphi 0, %s115
      %s130 = sphi 0, %s116
      %s134 = sphi 0, %s134
      %s136 = sphi 0, %s134
      %s137 = sphi 0, %s136
      %s151 = sphi 0, %s137
      %s155 = sphi 0, %s155
      %s157 = sphi 0, %s155
      %s158 = sphi 0, %s157
      %s172 = sphi 0, %s158
      %s176 = sphi 0, %s176
      %s178 = sphi 0, %s176
      %s179 = sphi 0, %s178
      %s193 = sphi 0, %s179
      %s197 = sphi 0, %s197
      %s199 = sphi 0, %s197
      %s200 = sphi 0, %s199
      %s214 = sphi 0, %s200
      %s220 = sphi 0, %s222
      %s223 = sphi 0, %s220
      %s224 = sphi 0, %s223
      %s240 = sphi 0, %s224
    $region4: #{tpu_custom_call.1} parent=1 // loop_header_branch
      %19 = sbr.rel (%p17) target = $region8
    $region5: #{tpu_custom_call.1} parent=1 // loop_body
      %s21 = ssub.s32 %s16, 1
      %s22 = ssub.s32 %s16, 2
      %s23 = sadd.s32 %s16, 1
      %s24 = ssub.s32 %s16, %s23
      %p25 = scmp.eq.s32.totalorder %s24, 0
      %s27 = sadd.s32 %s26, 1
      %s28 = scalar_select %p25, %s26, %s27
      %p31 = pneg %p25
      %p32 = scmp.eq.s32.totalorder %s16, 1
      %p33 = por %p31, %p32
      %p34 = scmp.ne.s32.totalorder %s26, %s29
      %p35 = scmp.eq.s32.totalorder %s16, 0
      %p36 = por %p34, %p35
      %p37 = scmp.ne.s32.totalorder %s26, %s29
      %p38 = scmp.eq.s32.totalorder %s21, 1
      %p39 = por %p37, %p38
      %p40 = scmp.ne.s32.totalorder %s29, %s30
      %p41 = scmp.eq.s32.totalorder %s21, 0
      %p42 = por %p40, %p41
      %p43 = scmp.ne.s32.totalorder %s29, %s30
      %p44 = scmp.eq.s32.totalorder %s22, 1
      %p45 = por %p43, %p44
      %p47 = scmp.ne.s32.totalorder %s30, %s46
      %p48 = scmp.eq.s32.totalorder %s22, 0
      %p49 = por %p47, %p48
      %s51 = sadd.s32 %s50, 1
      %p54 = scmp.eq.s32.totalorder %s16, 1
      %p55 = scmp.ne.s32.totalorder %s50, %s52
      %p56 = scmp.eq.s32.totalorder %s16, 0
      %p57 = por %p55, %p56
      %p58 = scmp.ne.s32.totalorder %s50, %s52
      %p59 = scmp.eq.s32.totalorder %s21, 1
      %p60 = por %p58, %p59
      %p61 = scmp.ne.s32.totalorder %s52, %s53
      %p62 = scmp.eq.s32.totalorder %s21, 0
      %p63 = por %p61, %p62
      %p64 = scmp.ne.s32.totalorder %s52, %s53
      %p65 = scmp.eq.s32.totalorder %s22, 1
      %p66 = por %p64, %p65
      %p68 = scmp.ne.s32.totalorder %s53, %s67
      %p69 = scmp.eq.s32.totalorder %s22, 0
      %p70 = por %p68, %p69
      %s72 = sadd.s32 %s71, 1
      %p75 = scmp.eq.s32.totalorder %s16, 1
      %p76 = scmp.ne.s32.totalorder %s71, %s73
      %p77 = scmp.eq.s32.totalorder %s16, 0
      %p78 = por %p76, %p77
      %p79 = scmp.ne.s32.totalorder %s71, %s73
      %p80 = scmp.eq.s32.totalorder %s21, 1
      %p81 = por %p79, %p80
      %p82 = scmp.ne.s32.totalorder %s73, %s74
      %p83 = scmp.eq.s32.totalorder %s21, 0
      %p84 = por %p82, %p83
      %p85 = scmp.ne.s32.totalorder %s73, %s74
      %p86 = scmp.eq.s32.totalorder %s22, 1
      %p87 = por %p85, %p86
      %p89 = scmp.ne.s32.totalorder %s74, %s88
      %p90 = scmp.eq.s32.totalorder %s22, 0
      %p91 = por %p89, %p90
      %s93 = sadd.s32 %s92, 1
      %p96 = scmp.eq.s32.totalorder %s16, 1
      %p97 = scmp.ne.s32.totalorder %s92, %s94
      %p98 = scmp.eq.s32.totalorder %s16, 0
      %p99 = por %p97, %p98
      %p100 = scmp.ne.s32.totalorder %s92, %s94
      %p101 = scmp.eq.s32.totalorder %s21, 1
      %p102 = por %p100, %p101
      %p103 = scmp.ne.s32.totalorder %s94, %s95
      %p104 = scmp.eq.s32.totalorder %s21, 0
      %p105 = por %p103, %p104
      %p106 = scmp.ne.s32.totalorder %s94, %s95
      %p107 = scmp.eq.s32.totalorder %s22, 1
      %p108 = por %p106, %p107
      %p110 = scmp.ne.s32.totalorder %s95, %s109
      %p111 = scmp.eq.s32.totalorder %s22, 0
      %p112 = por %p110, %p111
      %s114 = sadd.s32 %s113, 1
      %p117 = scmp.eq.s32.totalorder %s16, 1
      %p118 = scmp.ne.s32.totalorder %s113, %s115
      %p119 = scmp.eq.s32.totalorder %s16, 0
      %p120 = por %p118, %p119
      %p121 = scmp.ne.s32.totalorder %s113, %s115
      %p122 = scmp.eq.s32.totalorder %s21, 1
      %p123 = por %p121, %p122
      %p124 = scmp.ne.s32.totalorder %s115, %s116
      %p125 = scmp.eq.s32.totalorder %s21, 0
      %p126 = por %p124, %p125
      %p127 = scmp.ne.s32.totalorder %s115, %s116
      %p128 = scmp.eq.s32.totalorder %s22, 1
      %p129 = por %p127, %p128
      %p131 = scmp.ne.s32.totalorder %s116, %s130
      %p132 = scmp.eq.s32.totalorder %s22, 0
      %p133 = por %p131, %p132
      %s135 = sadd.s32 %s134, 1
      %p138 = scmp.eq.s32.totalorder %s16, 1
      %p139 = scmp.ne.s32.totalorder %s134, %s136
      %p140 = scmp.eq.s32.totalorder %s16, 0
      %p141 = por %p139, %p140
      %p142 = scmp.ne.s32.totalorder %s134, %s136
      %p143 = scmp.eq.s32.totalorder %s21, 1
      %p144 = por %p142, %p143
      %p145 = scmp.ne.s32.totalorder %s136, %s137
      %p146 = scmp.eq.s32.totalorder %s21, 0
      %p147 = por %p145, %p146
      %p148 = scmp.ne.s32.totalorder %s136, %s137
      %p149 = scmp.eq.s32.totalorder %s22, 1
      %p150 = por %p148, %p149
      %p152 = scmp.ne.s32.totalorder %s137, %s151
      %p153 = scmp.eq.s32.totalorder %s22, 0
      %p154 = por %p152, %p153
      %s156 = sadd.s32 %s155, 1
      %p159 = scmp.eq.s32.totalorder %s16, 1
      %p160 = scmp.ne.s32.totalorder %s155, %s157
      %p161 = scmp.eq.s32.totalorder %s16, 0
      %p162 = por %p160, %p161
      %p163 = scmp.ne.s32.totalorder %s155, %s157
      %p164 = scmp.eq.s32.totalorder %s21, 1
      %p165 = por %p163, %p164
      %p166 = scmp.ne.s32.totalorder %s157, %s158
      %p167 = scmp.eq.s32.totalorder %s21, 0
      %p168 = por %p166, %p167
      %p169 = scmp.ne.s32.totalorder %s157, %s158
      %p170 = scmp.eq.s32.totalorder %s22, 1
      %p171 = por %p169, %p170
      %p173 = scmp.ne.s32.totalorder %s158, %s172
      %p174 = scmp.eq.s32.totalorder %s22, 0
      %p175 = por %p173, %p174
      %s177 = sadd.s32 %s176, 1
      %p180 = scmp.eq.s32.totalorder %s16, 1
      %p181 = scmp.ne.s32.totalorder %s176, %s178
      %p182 = scmp.eq.s32.totalorder %s16, 0
      %p183 = por %p181, %p182
      %p184 = scmp.ne.s32.totalorder %s176, %s178
      %p185 = scmp.eq.s32.totalorder %s21, 1
      %p186 = por %p184, %p185
      %p187 = scmp.ne.s32.totalorder %s178, %s179
      %p188 = scmp.eq.s32.totalorder %s21, 0
      %p189 = por %p187, %p188
      %p190 = scmp.ne.s32.totalorder %s178, %s179
      %p191 = scmp.eq.s32.totalorder %s22, 1
      %p192 = por %p190, %p191
      %p194 = scmp.ne.s32.totalorder %s179, %s193
      %p195 = scmp.eq.s32.totalorder %s22, 0
      %p196 = por %p194, %p195
      %s198 = sadd.s32 %s197, 1
      %p201 = scmp.eq.s32.totalorder %s16, 1
      %p202 = scmp.ne.s32.totalorder %s197, %s199
      %p203 = scmp.eq.s32.totalorder %s16, 0
      %p204 = por %p202, %p203
      %p205 = scmp.ne.s32.totalorder %s197, %s199
      %p206 = scmp.eq.s32.totalorder %s21, 1
      %p207 = por %p205, %p206
      %p208 = scmp.ne.s32.totalorder %s199, %s200
      %p209 = scmp.eq.s32.totalorder %s21, 0
      %p210 = por %p208, %p209
      %p211 = scmp.ne.s32.totalorder %s199, %s200
      %p212 = scmp.eq.s32.totalorder %s22, 1
      %p213 = por %p211, %p212
      %p215 = scmp.ne.s32.totalorder %s200, %s214
      %p216 = scmp.eq.s32.totalorder %s22, 0
      %p217 = por %p215, %p216
      %s218 = ssub.s32 %s16, %s23
      %p219 = scmp.eq.s32.totalorder %s218, 0
      %s221 = sadd.s32 %s220, 1
      %s222 = scalar_select %p219, %s220, %s221
      %p225 = pneg %p219
      %p226 = scmp.eq.s32.totalorder %s16, 1
      %p227 = por %p225, %p226
      %p228 = scmp.ne.s32.totalorder %s220, %s223
      %p229 = scmp.eq.s32.totalorder %s16, 0
      %p230 = por %p228, %p229
      %p231 = scmp.ne.s32.totalorder %s220, %s223
      %p232 = scmp.eq.s32.totalorder %s21, 1
      %p233 = por %p231, %p232
      %p234 = scmp.ne.s32.totalorder %s223, %s224
      %p235 = scmp.eq.s32.totalorder %s21, 0
      %p236 = por %p234, %p235
      %p237 = scmp.ne.s32.totalorder %s223, %s224
      %p238 = scmp.eq.s32.totalorder %s22, 1
      %p239 = por %p237, %p238
      %p241 = scmp.ne.s32.totalorder %s224, %s240
      %p242 = scmp.eq.s32.totalorder %s22, 0
      %p243 = por %p241, %p242
      %p244 = scmp.le.s32.totalorder 1, %s16
      %p245 = scmp.lt.s32.totalorder %s16, 3
      %p246 = pnand %p244, %p245
      %p247 = pneg %p246
      // Predicated region
      $region9: #{tpu_custom_call.1} parent=5 // pred_check
        _
      $region10: #{tpu_custom_call.1} parent=5 // pred_check_branch
        %249 = sbr.rel (%p246) target = $region12
      $region11: #{tpu_custom_call.1} parent=5 // pred_region
        %s250 = ssub.s32 %s16, 1
        // Predicated region
        $region13: #{tpu_custom_call.1} parent=11 // pred_check
          %p251 = pneg %p63
        $region14: #{tpu_custom_call.1} parent=11 // pred_check_branch
          %253 = sbr.rel (%p251) target = $region16
        $region15: #{tpu_custom_call.1} parent=11 // pred_region
          _
        $region16: #{tpu_custom_call.1} parent=11 // pred_fallthru
          _
        // Predicated region
        $region17: #{tpu_custom_call.1} parent=11 // pred_check
          %p254 = pneg %p84
        $region18: #{tpu_custom_call.1} parent=11 // pred_check_branch
          %256 = sbr.rel (%p254) target = $region20
        $region19: #{tpu_custom_call.1} parent=11 // pred_region
          _
        $region20: #{tpu_custom_call.1} parent=11 // pred_fallthru
          _
        // Predicated region
        $region21: #{tpu_custom_call.1} parent=11 // pred_check
          %p257 = pneg %p105
        $region22: #{tpu_custom_call.1} parent=11 // pred_check_branch
          %259 = sbr.rel (%p257) target = $region24
        $region23: #{tpu_custom_call.1} parent=11 // pred_region
          _
        $region24: #{tpu_custom_call.1} parent=11 // pred_fallthru
          _
        // Predicated region
        $region25: #{tpu_custom_call.1} parent=11 // pred_check
          %p260 = pneg %p126
        $region26: #{tpu_custom_call.1} parent=11 // pred_check_branch
          %262 = sbr.rel (%p260) target = $region28
        $region27: #{tpu_custom_call.1} parent=11 // pred_region
          _
        $region28: #{tpu_custom_call.1} parent=11 // pred_fallthru
          _
        // Predicated region
        $region29: #{tpu_custom_call.1} parent=11 // pred_check
          %p263 = pneg %p147
        $region30: #{tpu_custom_call.1} parent=11 // pred_check_branch
          %265 = sbr.rel (%p263) target = $region32
        $region31: #{tpu_custom_call.1} parent=11 // pred_region
          %s267 = ssub.s32 1024, 1024
          %268 = vsyncadd [#allocation3], %s267
          %s269 = sshll.u32 [#allocation2], 4
          %s270 = int_to_ptr.vmem [resolvable:$true] %s269
          %275 = dma.hbm_to_vmem [thread:$0]  %s5, 1024, %s270, [#allocation3], 64, 64, 4
        $region32: #{tpu_custom_call.1} parent=11 // pred_fallthru
          _
        // Predicated region
        $region33: #{tpu_custom_call.1} parent=11 // pred_check
          %p276 = pneg %p168
        $region34: #{tpu_custom_call.1} parent=11 // pred_check_branch
          %278 = sbr.rel (%p276) target = $region36
        $region35: #{tpu_custom_call.1} parent=11 // pred_region
          _
        $region36: #{tpu_custom_call.1} parent=11 // pred_fallthru
          _
        // Predicated region
        $region37: #{tpu_custom_call.1} parent=11 // pred_check
          %p279 = pneg %p189
        $region38: #{tpu_custom_call.1} parent=11 // pred_check_branch
          %281 = sbr.rel (%p279) target = $region40
        $region39: #{tpu_custom_call.1} parent=11 // pred_region
          _
        $region40: #{tpu_custom_call.1} parent=11 // pred_fallthru
          _
        // Predicated region
        $region41: #{tpu_custom_call.1} parent=11 // pred_check
          %p282 = pneg %p210
        $region42: #{tpu_custom_call.1} parent=11 // pred_check_branch
          %284 = sbr.rel (%p282) target = $region44
        $region43: #{tpu_custom_call.1} parent=11 // pred_region
          _
        $region44: #{tpu_custom_call.1} parent=11 // pred_fallthru
          _
      $region12: #{tpu_custom_call.1} parent=5 // pred_fallthru
        _
      %p285 = scmp.lt.s32.totalorder %s16, 2
      // Predicated region
      $region45: #{tpu_custom_call.1} parent=5 // pred_check
        %p286 = pneg %p285
      $region46: #{tpu_custom_call.1} parent=5 // pred_check_branch
        %288 = sbr.rel (%p286) target = $region48
      $region47: #{tpu_custom_call.1} parent=5 // pred_region
        // Predicated region
        $region49: #{tpu_custom_call.1} parent=47 // pred_check
          %p289 = pneg %p36
        $region50: #{tpu_custom_call.1} parent=47 // pred_check_branch
          %291 = sbr.rel (%p289) target = $region52
        $region51: #{tpu_custom_call.1} parent=47 // pred_region
          %s292 = smul.u32 4, %s16
          %p293 = scmp.lt.s32.totalorder %s292, 7
          %s294 = scalar_select %p293, %s292, 7
          %s295 = smul.addr %s294, 4
          %s296 = scalar_lea.vmem %s0, %s295
          %s297 = smul.u32 4, %s16
        $region52: #{tpu_custom_call.1} parent=47 // pred_fallthru
          _
      $region48: #{tpu_custom_call.1} parent=5 // pred_fallthru
        _
      %p298 = scmp.le.s32.totalorder 1, %s16
      %p299 = scmp.lt.s32.totalorder %s16, 3
      %p300 = pnand %p298, %p299
      %p301 = pneg %p300
      // Predicated region
      $region53: #{tpu_custom_call.1} parent=5 // pred_check
        _
      $region54: #{tpu_custom_call.1} parent=5 // pred_check_branch
        %303 = sbr.rel (%p300) target = $region56
      $region55: #{tpu_custom_call.1} parent=5 // pred_region
        %s304 = ssub.s32 %s16, 1
        // Predicated region
        $region57: #{tpu_custom_call.1} parent=55 // pred_check
          %p305 = pneg %p147
        $region58: #{tpu_custom_call.1} parent=55 // pred_check_branch
          %307 = sbr.rel (%p305) target = $region60
        $region59: #{tpu_custom_call.1} parent=55 // pred_region
          %308 = dma.done [#allocation3], 1024
        $region60: #{tpu_custom_call.1} parent=55 // pred_fallthru
          _
        %s309 = smul.u32 4, %s21
        %p310 = scmp.lt.s32.totalorder %s309, 7
        %s311 = scalar_select %p310, %s309, 7
        %s312 = smul.addr %s311, 4
        %s313 = scalar_lea.vmem %s0, %s312
        %p314 = pneg %p42
        %p315 = pneg %p39
        %p316 = pneg %p63
        %p317 = pneg %p60
        %p318 = pneg %p84
        %p319 = pneg %p81
        %p320 = pneg %p105
        %p321 = pneg %p102
        %p322 = pneg %p126
        %p323 = pneg %p123
        %p324 = pneg %p147
        %p325 = pneg %p144
        %p326 = pneg %p168
        %p327 = pneg %p165
        %p328 = pneg %p189
        %p329 = pneg %p186
        %p330 = pneg %p210
        %p331 = pneg %p207
        %p332 = pneg %p236
        %p333 = pneg %p233
        %s334 = smul.u32 4, %s21
        %p335 = scmp.lt.s32.totalorder %s334, 7
        %s336 = scalar_select %p335, %s334, 7
        %s337 = smul.addr %s336, 8
        %s338 = scalar_lea.vmem %s9, %s337
        %s339 = smul.u32 4, %s21
        %p340 = scmp.lt.s32.totalorder %s339, 7
        %s341 = scalar_select %p340, %s339, 7
        %s342 = smul.addr %s341, 4
        %s343 = scalar_lea.vmem %s0, %s342
        %s344 = smul.u32 4, %s21
        %s345 = smul.u32 4, %s21
        %p346 = scmp.lt.s32.totalorder %s345, 7
        %s347 = scalar_select %p346, %s345, 7
        %s348 = smul.addr %s347, 8
        %s349 = scalar_lea.vmem %s9, %s348
        %s350 = smul.u32 4, %s21
        %v352 = vld [vmem:[%s343] sm:$0xf]
        %v353 = vld [vmem:[%s343 + $0x4] sm:$0xf]
        %v354 = vld [vmem:[%s343 + $0x8] sm:$0xf]
        %v355 = vld [vmem:[%s343 + $0xc] sm:$0xf]
        %v356 = vld [vmem:[%s1] sm:$0xf]
        %v357 = vld [vmem:[%s2] sm:$0x1]
        %v359 = vlaneseq
        %v360 = vshrl.u32 %v359, 7
        %v361 = vsub.s32 0, %v360
        %v362 = vrot.slane %v357, %v361
        %v368 = vunpack.c.l.b16 %v352
        %v369 = vunpack.c.l.b16 %v353
        %v370 = vunpack.c.l.b16 %v354
        %v371 = vunpack.c.l.b16 %v355
        %v372 = vpack.c.b16 %v369, %v368
        %v373 = vpack.c.b16 %v371, %v370
        %vm374 = vcmask 64512
        %v376 = vsel %vm374, %v372, 0
        %v379 = vsel %vm374, %v373, 0
        %vm381 = vcmask 1043456
        %v383 = vsel %vm381, %v356, 0
        %385 = vmatprep.subr.bf16.mxu0 0
        %386 = vmatpush1.bf16.msra.mxu0 %v383
        %387 = vmatprep.subr.bf16.mxu0 0
        %388 = vmatpush1.bf16.msra.mxu0 0
        %389 = vmatprep.subr.bf16.mxu0 0
        %390 = vmatpush1.bf16.msra.mxu0 0
        %391 = vmatprep.subr.bf16.mxu0 0
        %392 = vmatpush1.bf16.msra.mxu0 0
        %393 = vmatprep.subr.bf16.mxu0 0
        %394 = vmatpush1.bf16.msra.mxu0 0
        %395 = vmatprep.subr.bf16.mxu0 0
        %396 = vmatpush1.bf16.msra.mxu0 0
        %397 = vmatprep.subr.bf16.mxu0 0
        %398 = vmatpush1.bf16.msra.mxu0 0
        %399 = vmatprep.subr.bf16.mxu0 0
        %400 = vmatpush1.bf16.msra.mxu0 0
        %401 = vmatprep.subr.bf16.mxu0 0
        %402 = vmatpush1.bf16.msra.mxu0 0
        %403 = vmatprep.subr.bf16.mxu0 0
        %404 = vmatpush1.bf16.msra.mxu0 0
        %405 = vmatprep.subr.bf16.mxu0 0
        %406 = vmatpush1.bf16.msra.mxu0 0
        %407 = vmatprep.subr.bf16.mxu0 0
        %408 = vmatpush1.bf16.msra.mxu0 0
        %409 = vmatprep.subr.bf16.mxu0 0
        %410 = vmatpush1.bf16.msra.mxu0 0
        %411 = vmatprep.subr.bf16.mxu0 0
        %412 = vmatpush1.bf16.msra.mxu0 0
        %413 = vmatprep.subr.bf16.mxu0 0
        %414 = vmatpush1.bf16.msra.mxu0 0
        %415 = vmatprep.subr.bf16.mxu0 0
        %416 = vmatpush1.bf16.msra.mxu0 0
        %417 = vmatprep.mubr.bf16.mxu0 0
        %418 = vmatmul.mubr.bf16.gmra.mrb[0].mxu0 %v376
        %v419 = vpop.f32.mrb[0].mxu0
        %v420 = vadd.f32 %v362, %v419
        %v421 = vpop.f32.mrb[0].mxu0
        %v422 = vpop.f32.mrb[0].mxu0
        %v423 = vadd.f32 %v362, %v422
        %v424 = vpop.f32.mrb[0].mxu0
        %425 = vmatprep.mubr.bf16.mxu0 0
        %426 = vmatmul.mubr.bf16.gmra.mrb[0].mxu0 %v379
        %v427 = vpop.f32.mrb[0].mxu0
        %v428 = vadd.f32 %v362, %v427
        %v429 = vpop.f32.mrb[0].mxu0
        %v430 = vpop.f32.mrb[0].mxu0
        %v431 = vadd.f32 %v362, %v430
        %v432 = vpop.f32.mrb[0].mxu0
        %433 = vdwg.mxu0
        %v434 = vand.u32 2147483647, %v420
        %vm435 = vcmp.le.f32.partialorder %v434, 0.7853982
        %vm436 = vcmp.lt.s32.totalorder %v420, 0
        %v437 = vand.u32 %v420, 2139095040
        %v438 = vshrl.u32 %v437, 23
        %v439 = vsub.s32 %v438, 127
        %v440 = vand.u32 2147483647, %v420
        %v441 = vand.u32 %v440, 8388607
        %v442 = vor.u32 %v441, 8388608
        %v443 = vsub.s32 0, %v442
        %v444 = vadd.s32 %v439, 1
        %vm445 = vcmp.gt.s32.totalorder %v444, 0
        %v446 = vsel %vm445, %v444, 0
        %v447 = vshrl.u32 %v446, 5
        %v448 = vand.u32 %v446, 31
        %v449 = vsub.s32 32, %v448
        %v450 = vshrl.u32 683565275, %v449
        %v451 = vshll.u32 683565275, %v448
        %v452 = vshrl.u32 2475754826, %v449
        %v453 = vor.u32 %v451, %v452
        %v454 = vshll.u32 2475754826, %v448
        %v455 = vshrl.u32 2131351028, %v449
        %v456 = vor.u32 %v454, %v455
        %v457 = vshll.u32 2131351028, %v448
        %v458 = vshrl.u32 2102212464, %v449
        %v459 = vor.u32 %v457, %v458
        %v460 = vshll.u32 2102212464, %v448
        %v461 = vshrl.u32 920167782, %v449
        %v462 = vor.u32 %v460, %v461
        %v463 = vshll.u32 920167782, %v448
        %v464 = vshrl.u32 1326507024, %v449
        %v465 = vor.u32 %v463, %v464
        %vm466 = vcmp.lt.s32.totalorder %v447, 1
        %vm467 = vcmp.lt.s32.totalorder %v447, 2
        %vm468 = vcmp.lt.s32.totalorder %v447, 3
        %vm469 = vcmp.lt.s32.totalorder %v447, 4
        %v470 = vsel %vm466, %v450, %v453
        %v471 = vsel %vm469, %v459, 2102212464
        %v472 = vsel %vm468, %v456, %v471
        %v473 = vsel %vm467, %v470, %v472
        %v474 = vsel %vm466, %v453, %v456
        %v475 = vsel %vm469, %v462, 920167782
        %v476 = vsel %vm468, %v459, %v475
        %v477 = vsel %vm467, %v474, %v476
        %v478 = vsel %vm466, %v456, %v459
        %v479 = vsel %vm469, %v465, 1326507024
        %v480 = vsel %vm468, %v462, %v479
        %v481 = vsel %vm467, %v478, %v480
        %v482 = vshll.u32 %v442, 8
        %v483 = vmul.u32.u64.compose %v482, %v481
        %v484 = vextract.low.u32 %v483
        %v485 = vextract.high.u32 %v483
        %v486 = vmul.u32.u64.compose %v482, %v477
        %v487 = vextract.low.u32 %v486
        %v488 = vextract.high.u32 %v486
        %v489 = vmul.u32 %v482, %v473
        %v490 = vadd.s32 %v485, %v487
        %vm491 = vc.u32 %v485, %v487
        %v492 = vadd.s32 %v488, 1
        %v493 = vsel %vm491, %v492, %v488
        %v494 = vadd.s32 %v489, %v493
        %v495 = vadd.s32 %v494, 536870912
        %v496 = vshrl.u32 %v495, 30
        %v497 = vshll.u32 %v496, 30
        %v498 = vsub.s32 %v494, %v497
        %vm499 = vcmp.lt.s32.totalorder %v498, 0
        %v500 = vsub.s32 0, %v498
        %v501 = vsel %vm499, %v500, %v498
        %v502 = vclz %v501
        %v503 = vsub.s32 %v502, 2
        %vm504 = vcmp.gt.s32.totalorder 0, %v503
        %v505 = vsel %vm504, 0, %v503
        %v506 = vsub.s32 32, %v505
        %v507 = vshll.u32 %v498, %v505
        %v508 = vshrl.u32 %v490, %v506
        %v509 = vor.u32 %v507, %v508
        %v510 = vsub.s32 4294967266, %v505
        %v511 = vadd.s32 %v510, 127
        %v512 = vshll.u32 %v511, 23
        %v513 = vor.u32 4788187, %v512
        %v514 = vand.u32 2147483647, %v513
        %v516 = vcvt.s32.f32 %v509
        %v517 = vmul.f32 %v516, %v514
        %v518 = vxor.u32 %v517, 2147483648
        %v519 = vsel %vm436, %v518, %v517
        %v520 = vsub.s32 4, %v496
        %v521 = vsel %vm436, %v520, %v496
        %v522 = vsel %vm435, %v420, %v519
        %v523 = vsel %vm435, 0, %v521
        %v524 = vcosq.f32.pop %v522
        %v525 = vsinq.f32.pop %v522
        %vm526 = vweird.f32 %v420
        %v527 = vadd.s32 %v523, 3
        %v528 = vand.u32 %v527, 3
        %vm529 = vcmp.lt.s32.totalorder %v528, 2
        %vm530 = vcmp.eq.s32.totalorder %v528, 0
        %v531 = vxor.u32 %v525, 2147483648
        %v532 = vsel %vm530, %v524, %v531
        %vm533 = vcmp.eq.s32.totalorder %v528, 2
        %v534 = vxor.u32 %v524, 2147483648
        %v535 = vsel %vm533, %v534, %v525
        %v536 = vsel %vm529, %v532, %v535
        %v537 = vsel %vm526, nan, %v536
        %v538 = vand.u32 2147483647, %v423
        %vm539 = vcmp.le.f32.partialorder %v538, 0.7853982
        %vm540 = vcmp.lt.s32.totalorder %v423, 0
        %v541 = vand.u32 %v423, 2139095040
        %v542 = vshrl.u32 %v541, 23
        %v543 = vsub.s32 %v542, 127
        %v544 = vand.u32 2147483647, %v423
        %v545 = vand.u32 %v544, 8388607
        %v546 = vor.u32 %v545, 8388608
        %v547 = vsub.s32 0, %v546
        %v548 = vadd.s32 %v543, 1
        %vm549 = vcmp.gt.s32.totalorder %v548, 0
        %v550 = vsel %vm549, %v548, 0
        %v551 = vshrl.u32 %v550, 5
        %v552 = vand.u32 %v550, 31
        %v553 = vsub.s32 32, %v552
        %v554 = vshrl.u32 683565275, %v553
        %v555 = vshll.u32 683565275, %v552
        %v556 = vshrl.u32 2475754826, %v553
        %v557 = vor.u32 %v555, %v556
        %v558 = vshll.u32 2475754826, %v552
        %v559 = vshrl.u32 2131351028, %v553
        %v560 = vor.u32 %v558, %v559
        %v561 = vshll.u32 2131351028, %v552
        %v562 = vshrl.u32 2102212464, %v553
        %v563 = vor.u32 %v561, %v562
        %v564 = vshll.u32 2102212464, %v552
        %v565 = vshrl.u32 920167782, %v553
        %v566 = vor.u32 %v564, %v565
        %v567 = vshll.u32 920167782, %v552
        %v568 = vshrl.u32 1326507024, %v553
        %v569 = vor.u32 %v567, %v568
        %vm570 = vcmp.lt.s32.totalorder %v551, 1
        %vm571 = vcmp.lt.s32.totalorder %v551, 2
        %vm572 = vcmp.lt.s32.totalorder %v551, 3
        %vm573 = vcmp.lt.s32.totalorder %v551, 4
        %v574 = vsel %vm570, %v554, %v557
        %v575 = vsel %vm573, %v563, 2102212464
        %v576 = vsel %vm572, %v560, %v575
        %v577 = vsel %vm571, %v574, %v576
        %v578 = vsel %vm570, %v557, %v560
        %v579 = vsel %vm573, %v566, 920167782
        %v580 = vsel %vm572, %v563, %v579
        %v581 = vsel %vm571, %v578, %v580
        %v582 = vsel %vm570, %v560, %v563
        %v583 = vsel %vm573, %v569, 1326507024
        %v584 = vsel %vm572, %v566, %v583
        %v585 = vsel %vm571, %v582, %v584
        %v586 = vshll.u32 %v546, 8
        %v587 = vmul.u32.u64.compose %v586, %v585
        %v588 = vextract.low.u32 %v587
        %v589 = vextract.high.u32 %v587
        %v590 = vmul.u32.u64.compose %v586, %v581
        %v591 = vextract.low.u32 %v590
        %v592 = vextract.high.u32 %v590
        %v593 = vmul.u32 %v586, %v577
        %v594 = vadd.s32 %v589, %v591
        %vm595 = vc.u32 %v589, %v591
        %v596 = vadd.s32 %v592, 1
        %v597 = vsel %vm595, %v596, %v592
        %v598 = vadd.s32 %v593, %v597
        %v599 = vadd.s32 %v598, 536870912
        %v600 = vshrl.u32 %v599, 30
        %v601 = vshll.u32 %v600, 30
        %v602 = vsub.s32 %v598, %v601
        %vm603 = vcmp.lt.s32.totalorder %v602, 0
        %v604 = vsub.s32 0, %v602
        %v605 = vsel %vm603, %v604, %v602
        %v606 = vclz %v605
        %v607 = vsub.s32 %v606, 2
        %vm608 = vcmp.gt.s32.totalorder 0, %v607
        %v609 = vsel %vm608, 0, %v607
        %v610 = vsub.s32 32, %v609
        %v611 = vshll.u32 %v602, %v609
        %v612 = vshrl.u32 %v594, %v610
        %v613 = vor.u32 %v611, %v612
        %v614 = vsub.s32 4294967266, %v609
        %v615 = vadd.s32 %v614, 127
        %v616 = vshll.u32 %v615, 23
        %v617 = vor.u32 4788187, %v616
        %v618 = vand.u32 2147483647, %v617
        %v620 = vcvt.s32.f32 %v613
        %v621 = vmul.f32 %v620, %v618
        %v622 = vxor.u32 %v621, 2147483648
        %v623 = vsel %vm540, %v622, %v621
        %v624 = vsub.s32 4, %v600
        %v625 = vsel %vm540, %v624, %v600
        %v626 = vsel %vm539, %v423, %v623
        %v627 = vsel %vm539, 0, %v625
        %v628 = vcosq.f32.pop %v626
        %v629 = vsinq.f32.pop %v626
        %vm630 = vweird.f32 %v423
        %v631 = vadd.s32 %v627, 3
        %v632 = vand.u32 %v631, 3
        %vm633 = vcmp.lt.s32.totalorder %v632, 2
        %vm634 = vcmp.eq.s32.totalorder %v632, 0
        %v635 = vxor.u32 %v629, 2147483648
        %v636 = vsel %vm634, %v628, %v635
        %vm637 = vcmp.eq.s32.totalorder %v632, 2
        %v638 = vxor.u32 %v628, 2147483648
        %v639 = vsel %vm637, %v638, %v629
        %v640 = vsel %vm633, %v636, %v639
        %v641 = vsel %vm630, nan, %v640
        %v642 = vand.u32 2147483647, %v428
        %vm643 = vcmp.le.f32.partialorder %v642, 0.7853982
        %vm644 = vcmp.lt.s32.totalorder %v428, 0
        %v645 = vand.u32 %v428, 2139095040
        %v646 = vshrl.u32 %v645, 23
        %v647 = vsub.s32 %v646, 127
        %v648 = vand.u32 2147483647, %v428
        %v649 = vand.u32 %v648, 8388607
        %v650 = vor.u32 %v649, 8388608
        %v651 = vsub.s32 0, %v650
        %v652 = vadd.s32 %v647, 1
        %vm653 = vcmp.gt.s32.totalorder %v652, 0
        %v654 = vsel %vm653, %v652, 0
        %v655 = vshrl.u32 %v654, 5
        %v656 = vand.u32 %v654, 31
        %v657 = vsub.s32 32, %v656
        %v658 = vshrl.u32 683565275, %v657
        %v659 = vshll.u32 683565275, %v656
        %v660 = vshrl.u32 2475754826, %v657
        %v661 = vor.u32 %v659, %v660
        %v662 = vshll.u32 2475754826, %v656
        %v663 = vshrl.u32 2131351028, %v657
        %v664 = vor.u32 %v662, %v663
        %v665 = vshll.u32 2131351028, %v656
        %v666 = vshrl.u32 2102212464, %v657
        %v667 = vor.u32 %v665, %v666
        %v668 = vshll.u32 2102212464, %v656
        %v669 = vshrl.u32 920167782, %v657
        %v670 = vor.u32 %v668, %v669
        %v671 = vshll.u32 920167782, %v656
        %v672 = vshrl.u32 1326507024, %v657
        %v673 = vor.u32 %v671, %v672
        %vm674 = vcmp.lt.s32.totalorder %v655, 1
        %vm675 = vcmp.lt.s32.totalorder %v655, 2
        %vm676 = vcmp.lt.s32.totalorder %v655, 3
        %vm677 = vcmp.lt.s32.totalorder %v655, 4
        %v678 = vsel %vm674, %v658, %v661
        %v679 = vsel %vm677, %v667, 2102212464
        %v680 = vsel %vm676, %v664, %v679
        %v681 = vsel %vm675, %v678, %v680
        %v682 = vsel %vm674, %v661, %v664
        %v683 = vsel %vm677, %v670, 920167782
        %v684 = vsel %vm676, %v667, %v683
        %v685 = vsel %vm675, %v682, %v684
        %v686 = vsel %vm674, %v664, %v667
        %v687 = vsel %vm677, %v673, 1326507024
        %v688 = vsel %vm676, %v670, %v687
        %v689 = vsel %vm675, %v686, %v688
        %v690 = vshll.u32 %v650, 8
        %v691 = vmul.u32.u64.compose %v690, %v689
        %v692 = vextract.low.u32 %v691
        %v693 = vextract.high.u32 %v691
        %v694 = vmul.u32.u64.compose %v690, %v685
        %v695 = vextract.low.u32 %v694
        %v696 = vextract.high.u32 %v694
        %v697 = vmul.u32 %v690, %v681
        %v698 = vadd.s32 %v693, %v695
        %vm699 = vc.u32 %v693, %v695
        %v700 = vadd.s32 %v696, 1
        %v701 = vsel %vm699, %v700, %v696
        %v702 = vadd.s32 %v697, %v701
        %v703 = vadd.s32 %v702, 536870912
        %v704 = vshrl.u32 %v703, 30
        %v705 = vshll.u32 %v704, 30
        %v706 = vsub.s32 %v702, %v705
        %vm707 = vcmp.lt.s32.totalorder %v706, 0
        %v708 = vsub.s32 0, %v706
        %v709 = vsel %vm707, %v708, %v706
        %v710 = vclz %v709
        %v711 = vsub.s32 %v710, 2
        %vm712 = vcmp.gt.s32.totalorder 0, %v711
        %v713 = vsel %vm712, 0, %v711
        %v714 = vsub.s32 32, %v713
        %v715 = vshll.u32 %v706, %v713
        %v716 = vshrl.u32 %v698, %v714
        %v717 = vor.u32 %v715, %v716
        %v718 = vsub.s32 4294967266, %v713
        %v719 = vadd.s32 %v718, 127
        %v720 = vshll.u32 %v719, 23
        %v721 = vor.u32 4788187, %v720
        %v722 = vand.u32 2147483647, %v721
        %v724 = vcvt.s32.f32 %v717
        %v725 = vmul.f32 %v724, %v722
        %v726 = vxor.u32 %v725, 2147483648
        %v727 = vsel %vm644, %v726, %v725
        %v728 = vsub.s32 4, %v704
        %v729 = vsel %vm644, %v728, %v704
        %v730 = vsel %vm643, %v428, %v727
        %v731 = vsel %vm643, 0, %v729
        %v732 = vcosq.f32.pop %v730
        %v733 = vsinq.f32.pop %v730
        %vm734 = vweird.f32 %v428
        %v735 = vadd.s32 %v731, 3
        %v736 = vand.u32 %v735, 3
        %vm737 = vcmp.lt.s32.totalorder %v736, 2
        %vm738 = vcmp.eq.s32.totalorder %v736, 0
        %v739 = vxor.u32 %v733, 2147483648
        %v740 = vsel %vm738, %v732, %v739
        %vm741 = vcmp.eq.s32.totalorder %v736, 2
        %v742 = vxor.u32 %v732, 2147483648
        %v743 = vsel %vm741, %v742, %v733
        %v744 = vsel %vm737, %v740, %v743
        %v745 = vsel %vm734, nan, %v744
        %v746 = vand.u32 2147483647, %v431
        %vm747 = vcmp.le.f32.partialorder %v746, 0.7853982
        %vm748 = vcmp.lt.s32.totalorder %v431, 0
        %v749 = vand.u32 %v431, 2139095040
        %v750 = vshrl.u32 %v749, 23
        %v751 = vsub.s32 %v750, 127
        %v752 = vand.u32 2147483647, %v431
        %v753 = vand.u32 %v752, 8388607
        %v754 = vor.u32 %v753, 8388608
        %v755 = vsub.s32 0, %v754
        %v756 = vadd.s32 %v751, 1
        %vm757 = vcmp.gt.s32.totalorder %v756, 0
        %v758 = vsel %vm757, %v756, 0
        %v759 = vshrl.u32 %v758, 5
        %v760 = vand.u32 %v758, 31
        %v761 = vsub.s32 32, %v760
        %v762 = vshrl.u32 683565275, %v761
        %v763 = vshll.u32 683565275, %v760
        %v764 = vshrl.u32 2475754826, %v761
        %v765 = vor.u32 %v763, %v764
        %v766 = vshll.u32 2475754826, %v760
        %v767 = vshrl.u32 2131351028, %v761
        %v768 = vor.u32 %v766, %v767
        %v769 = vshll.u32 2131351028, %v760
        %v770 = vshrl.u32 2102212464, %v761
        %v771 = vor.u32 %v769, %v770
        %v772 = vshll.u32 2102212464, %v760
        %v773 = vshrl.u32 920167782, %v761
        %v774 = vor.u32 %v772, %v773
        %v775 = vshll.u32 920167782, %v760
        %v776 = vshrl.u32 1326507024, %v761
        %v777 = vor.u32 %v775, %v776
        %vm778 = vcmp.lt.s32.totalorder %v759, 1
        %vm779 = vcmp.lt.s32.totalorder %v759, 2
        %vm780 = vcmp.lt.s32.totalorder %v759, 3
        %vm781 = vcmp.lt.s32.totalorder %v759, 4
        %v782 = vsel %vm778, %v762, %v765
        %v783 = vsel %vm781, %v771, 2102212464
        %v784 = vsel %vm780, %v768, %v783
        %v785 = vsel %vm779, %v782, %v784
        %v786 = vsel %vm778, %v765, %v768
        %v787 = vsel %vm781, %v774, 920167782
        %v788 = vsel %vm780, %v771, %v787
        %v789 = vsel %vm779, %v786, %v788
        %v790 = vsel %vm778, %v768, %v771
        %v791 = vsel %vm781, %v777, 1326507024
        %v792 = vsel %vm780, %v774, %v791
        %v793 = vsel %vm779, %v790, %v792
        %v794 = vshll.u32 %v754, 8
        %v795 = vmul.u32.u64.compose %v794, %v793
        %v796 = vextract.low.u32 %v795
        %v797 = vextract.high.u32 %v795
        %v798 = vmul.u32.u64.compose %v794, %v789
        %v799 = vextract.low.u32 %v798
        %v800 = vextract.high.u32 %v798
        %v801 = vmul.u32 %v794, %v785
        %v802 = vadd.s32 %v797, %v799
        %vm803 = vc.u32 %v797, %v799
        %v804 = vadd.s32 %v800, 1
        %v805 = vsel %vm803, %v804, %v800
        %v806 = vadd.s32 %v801, %v805
        %v807 = vadd.s32 %v806, 536870912
        %v808 = vshrl.u32 %v807, 30
        %v809 = vshll.u32 %v808, 30
        %v810 = vsub.s32 %v806, %v809
        %vm811 = vcmp.lt.s32.totalorder %v810, 0
        %v812 = vsub.s32 0, %v810
        %v813 = vsel %vm811, %v812, %v810
        %v814 = vclz %v813
        %v815 = vsub.s32 %v814, 2
        %vm816 = vcmp.gt.s32.totalorder 0, %v815
        %v817 = vsel %vm816, 0, %v815
        %v818 = vsub.s32 32, %v817
        %v819 = vshll.u32 %v810, %v817
        %v820 = vshrl.u32 %v802, %v818
        %v821 = vor.u32 %v819, %v820
        %v822 = vsub.s32 4294967266, %v817
        %v823 = vadd.s32 %v822, 127
        %v824 = vshll.u32 %v823, 23
        %v825 = vor.u32 4788187, %v824
        %v826 = vand.u32 2147483647, %v825
        %v828 = vcvt.s32.f32 %v821
        %v829 = vmul.f32 %v828, %v826
        %v830 = vxor.u32 %v829, 2147483648
        %v831 = vsel %vm748, %v830, %v829
        %v832 = vsub.s32 4, %v808
        %v833 = vsel %vm748, %v832, %v808
        %v834 = vsel %vm747, %v431, %v831
        %v835 = vsel %vm747, 0, %v833
        %v836 = vcosq.f32.pop %v834
        %v837 = vsinq.f32.pop %v834
        %vm838 = vweird.f32 %v431
        %v839 = vadd.s32 %v835, 3
        %v840 = vand.u32 %v839, 3
        %vm841 = vcmp.lt.s32.totalorder %v840, 2
        %vm842 = vcmp.eq.s32.totalorder %v840, 0
        %v843 = vxor.u32 %v837, 2147483648
        %v844 = vsel %vm842, %v836, %v843
        %vm845 = vcmp.eq.s32.totalorder %v840, 2
        %v846 = vxor.u32 %v836, 2147483648
        %v847 = vsel %vm845, %v846, %v837
        %v848 = vsel %vm841, %v844, %v847
        %v849 = vsel %vm838, nan, %v848
        %v850 = vpack.c.bf16 %v641, %v537
        %v851 = vpack.c.bf16 %v849, %v745
        %v852 = vld [vmem:[%s3] sm:$0xf]
        %v853 = vld [vmem:[%s3 + $0x4] sm:$0xf]
        %v854 = vld [vmem:[%s3 + $0x8] sm:$0xf]
        %v855 = vld [vmem:[%s3 + $0xc] sm:$0xf]
        %v856 = vld [vmem:[%s3 + $0x10] sm:$0xf]
        %v857 = vld [vmem:[%s3 + $0x14] sm:$0xf]
        %v858 = vld [vmem:[%s3 + $0x18] sm:$0xf]
        %v859 = vld [vmem:[%s3 + $0x1c] sm:$0xf]
        %v860 = vld [vmem:[%s3 + $0x20] sm:$0xf]
        %v861 = vld [vmem:[%s3 + $0x24] sm:$0xf]
        %v862 = vld [vmem:[%s3 + $0x28] sm:$0xf]
        %v863 = vld [vmem:[%s3 + $0x2c] sm:$0xf]
        %v864 = vld [vmem:[%s3 + $0x30] sm:$0xf]
        %v865 = vld [vmem:[%s3 + $0x34] sm:$0xf]
        %v866 = vld [vmem:[%s3 + $0x38] sm:$0xf]
        %v867 = vld [vmem:[%s3 + $0x3c] sm:$0xf]
        %v868 = vld [vmem:[%s4] sm:$0x1]
        %v870 = vlaneseq
        %v871 = vshrl.u32 %v870, 7
        %v872 = vsub.s32 0, %v871
        %v873 = vrot.slane %v868, %v872
        %v891 = vunpack.c.l.b16 %v852
        %v892 = vunpack.c.l.b16 %v853
        %v893 = vunpack.c.l.b16 %v854
        %v894 = vunpack.c.l.b16 %v855
        %v895 = vunpack.c.l.b16 %v856
        %v896 = vunpack.c.l.b16 %v857
        %v897 = vunpack.c.l.b16 %v858
        %v898 = vunpack.c.l.b16 %v859
        %v899 = vunpack.c.l.b16 %v860
        %v900 = vunpack.c.l.b16 %v861
        %v901 = vunpack.c.l.b16 %v862
        %v902 = vunpack.c.l.b16 %v863
        %v903 = vunpack.c.l.b16 %v864
        %v904 = vunpack.c.l.b16 %v865
        %v905 = vunpack.c.l.b16 %v866
        %v906 = vunpack.c.l.b16 %v867
        %v907 = vpack.c.b16 %v892, %v891
        %v908 = vpack.c.b16 %v894, %v893
        %v909 = vpack.c.b16 %v896, %v895
        %v910 = vpack.c.b16 %v898, %v897
        %v911 = vpack.c.b16 %v900, %v899
        %v912 = vpack.c.b16 %v902, %v901
        %v913 = vpack.c.b16 %v904, %v903
        %v914 = vpack.c.b16 %v906, %v905
        %923 = vmatprep.subr.bf16.mxu0 0
        %924 = vmatpush1.bf16.msra.mxu0 %v907
        %925 = vmatprep.subr.bf16.mxu0 0
        %926 = vmatpush1.bf16.msra.mxu0 %v908
        %927 = vmatprep.subr.bf16.mxu0 0
        %928 = vmatpush1.bf16.msra.mxu0 %v909
        %929 = vmatprep.subr.bf16.mxu0 0
        %930 = vmatpush1.bf16.msra.mxu0 %v910
        %931 = vmatprep.subr.bf16.mxu0 0
        %932 = vmatpush1.bf16.msra.mxu0 %v911
        %933 = vmatprep.subr.bf16.mxu0 0
        %934 = vmatpush1.bf16.msra.mxu0 %v912
        %935 = vmatprep.subr.bf16.mxu0 0
        %936 = vmatpush1.bf16.msra.mxu0 %v913
        %937 = vmatprep.subr.bf16.mxu0 0
        %938 = vmatpush1.bf16.msra.mxu0 %v914
        %939 = vmatprep.subr.bf16.mxu0 0
        %940 = vmatpush1.bf16.msra.mxu0 0
        %941 = vmatprep.subr.bf16.mxu0 0
        %942 = vmatpush1.bf16.msra.mxu0 0
        %943 = vmatprep.subr.bf16.mxu0 0
        %944 = vmatpush1.bf16.msra.mxu0 0
        %945 = vmatprep.subr.bf16.mxu0 0
        %946 = vmatpush1.bf16.msra.mxu0 0
        %947 = vmatprep.subr.bf16.mxu0 0
        %948 = vmatpush1.bf16.msra.mxu0 0
        %949 = vmatprep.subr.bf16.mxu0 0
        %950 = vmatpush1.bf16.msra.mxu0 0
        %951 = vmatprep.subr.bf16.mxu0 0
        %952 = vmatpush1.bf16.msra.mxu0 0
        %953 = vmatprep.subr.bf16.mxu0 0
        %954 = vmatpush1.bf16.msra.mxu0 0
        %955 = vmatprep.mubr.bf16.mxu0 0
        %956 = vmatmul.mubr.bf16.gmra.mrb[0].mxu0 %v850
        %v957 = vpop.f32.mrb[0].mxu0
        %v958 = vadd.f32 %v873, %v957
        %v959 = vpop.f32.mrb[0].mxu0
        %v960 = vpop.f32.mrb[0].mxu0
        %v961 = vadd.f32 %v873, %v960
        %v962 = vpop.f32.mrb[0].mxu0
        %963 = vmatprep.mubr.bf16.mxu0 0
        %964 = vmatmul.mubr.bf16.gmra.mrb[0].mxu0 %v851
        %v965 = vpop.f32.mrb[0].mxu0
        %v966 = vadd.f32 %v873, %v965
        %v967 = vpop.f32.mrb[0].mxu0
        %v968 = vpop.f32.mrb[0].mxu0
        %v969 = vadd.f32 %v873, %v968
        %v970 = vpop.f32.mrb[0].mxu0
        %971 = vdwg.mxu0
        %v972 = vand.u32 2147483647, %v958
        %vm973 = vcmp.le.f32.partialorder %v972, 0.7853982
        %vm974 = vcmp.lt.s32.totalorder %v958, 0
        %v975 = vand.u32 %v958, 2139095040
        %v976 = vshrl.u32 %v975, 23
        %v977 = vsub.s32 %v976, 127
        %v978 = vand.u32 2147483647, %v958
        %v979 = vand.u32 %v978, 8388607
        %v980 = vor.u32 %v979, 8388608
        %v981 = vsub.s32 0, %v980
        %v982 = vadd.s32 %v977, 1
        %vm983 = vcmp.gt.s32.totalorder %v982, 0
        %v984 = vsel %vm983, %v982, 0
        %v985 = vshrl.u32 %v984, 5
        %v986 = vand.u32 %v984, 31
        %v987 = vsub.s32 32, %v986
        %v988 = vshrl.u32 683565275, %v987
        %v989 = vshll.u32 683565275, %v986
        %v990 = vshrl.u32 2475754826, %v987
        %v991 = vor.u32 %v989, %v990
        %v992 = vshll.u32 2475754826, %v986
        %v993 = vshrl.u32 2131351028, %v987
        %v994 = vor.u32 %v992, %v993
        %v995 = vshll.u32 2131351028, %v986
        %v996 = vshrl.u32 2102212464, %v987
        %v997 = vor.u32 %v995, %v996
        %v998 = vshll.u32 2102212464, %v986
        %v999 = vshrl.u32 920167782, %v987
        %v1000 = vor.u32 %v998, %v999
        %v1001 = vshll.u32 920167782, %v986
        %v1002 = vshrl.u32 1326507024, %v987
        %v1003 = vor.u32 %v1001, %v1002
        %vm1004 = vcmp.lt.s32.totalorder %v985, 1
        %vm1005 = vcmp.lt.s32.totalorder %v985, 2
        %vm1006 = vcmp.lt.s32.totalorder %v985, 3
        %vm1007 = vcmp.lt.s32.totalorder %v985, 4
        %v1008 = vsel %vm1004, %v988, %v991
        %v1009 = vsel %vm1007, %v997, 2102212464
        %v1010 = vsel %vm1006, %v994, %v1009
        %v1011 = vsel %vm1005, %v1008, %v1010
        %v1012 = vsel %vm1004, %v991, %v994
        %v1013 = vsel %vm1007, %v1000, 920167782
        %v1014 = vsel %vm1006, %v997, %v1013
        %v1015 = vsel %vm1005, %v1012, %v1014
        %v1016 = vsel %vm1004, %v994, %v997
        %v1017 = vsel %vm1007, %v1003, 1326507024
        %v1018 = vsel %vm1006, %v1000, %v1017
        %v1019 = vsel %vm1005, %v1016, %v1018
        %v1020 = vshll.u32 %v980, 8
        %v1021 = vmul.u32.u64.compose %v1020, %v1019
        %v1022 = vextract.low.u32 %v1021
        %v1023 = vextract.high.u32 %v1021
        %v1024 = vmul.u32.u64.compose %v1020, %v1015
        %v1025 = vextract.low.u32 %v1024
        %v1026 = vextract.high.u32 %v1024
        %v1027 = vmul.u32 %v1020, %v1011
        %v1028 = vadd.s32 %v1023, %v1025
        %vm1029 = vc.u32 %v1023, %v1025
        %v1030 = vadd.s32 %v1026, 1
        %v1031 = vsel %vm1029, %v1030, %v1026
        %v1032 = vadd.s32 %v1027, %v1031
        %v1033 = vadd.s32 %v1032, 536870912
        %v1034 = vshrl.u32 %v1033, 30
        %v1035 = vshll.u32 %v1034, 30
        %v1036 = vsub.s32 %v1032, %v1035
        %vm1037 = vcmp.lt.s32.totalorder %v1036, 0
        %v1038 = vsub.s32 0, %v1036
        %v1039 = vsel %vm1037, %v1038, %v1036
        %v1040 = vclz %v1039
        %v1041 = vsub.s32 %v1040, 2
        %vm1042 = vcmp.gt.s32.totalorder 0, %v1041
        %v1043 = vsel %vm1042, 0, %v1041
        %v1044 = vsub.s32 32, %v1043
        %v1045 = vshll.u32 %v1036, %v1043
        %v1046 = vshrl.u32 %v1028, %v1044
        %v1047 = vor.u32 %v1045, %v1046
        %v1048 = vsub.s32 4294967266, %v1043
        %v1049 = vadd.s32 %v1048, 127
        %v1050 = vshll.u32 %v1049, 23
        %v1051 = vor.u32 4788187, %v1050
        %v1052 = vand.u32 2147483647, %v1051
        %v1054 = vcvt.s32.f32 %v1047
        %v1055 = vmul.f32 %v1054, %v1052
        %v1056 = vxor.u32 %v1055, 2147483648
        %v1057 = vsel %vm974, %v1056, %v1055
        %v1058 = vsub.s32 4, %v1034
        %v1059 = vsel %vm974, %v1058, %v1034
        %v1060 = vsel %vm973, %v958, %v1057
        %v1061 = vsel %vm973, 0, %v1059
        %v1062 = vcosq.f32.pop %v1060
        %v1063 = vsinq.f32.pop %v1060
        %vm1064 = vweird.f32 %v958
        %v1065 = vadd.s32 %v1061, 3
        %v1066 = vand.u32 %v1065, 3
        %vm1067 = vcmp.lt.s32.totalorder %v1066, 2
        %vm1068 = vcmp.eq.s32.totalorder %v1066, 0
        %v1069 = vxor.u32 %v1063, 2147483648
        %v1070 = vsel %vm1068, %v1062, %v1069
        %vm1071 = vcmp.eq.s32.totalorder %v1066, 2
        %v1072 = vxor.u32 %v1062, 2147483648
        %v1073 = vsel %vm1071, %v1072, %v1063
        %v1074 = vsel %vm1067, %v1070, %v1073
        %v1075 = vsel %vm1064, nan, %v1074
        %v1076 = vand.u32 2147483647, %v961
        %vm1077 = vcmp.le.f32.partialorder %v1076, 0.7853982
        %vm1078 = vcmp.lt.s32.totalorder %v961, 0
        %v1079 = vand.u32 %v961, 2139095040
        %v1080 = vshrl.u32 %v1079, 23
        %v1081 = vsub.s32 %v1080, 127
        %v1082 = vand.u32 2147483647, %v961
        %v1083 = vand.u32 %v1082, 8388607
        %v1084 = vor.u32 %v1083, 8388608
        %v1085 = vsub.s32 0, %v1084
        %v1086 = vadd.s32 %v1081, 1
        %vm1087 = vcmp.gt.s32.totalorder %v1086, 0
        %v1088 = vsel %vm1087, %v1086, 0
        %v1089 = vshrl.u32 %v1088, 5
        %v1090 = vand.u32 %v1088, 31
        %v1091 = vsub.s32 32, %v1090
        %v1092 = vshrl.u32 683565275, %v1091
        %v1093 = vshll.u32 683565275, %v1090
        %v1094 = vshrl.u32 2475754826, %v1091
        %v1095 = vor.u32 %v1093, %v1094
        %v1096 = vshll.u32 2475754826, %v1090
        %v1097 = vshrl.u32 2131351028, %v1091
        %v1098 = vor.u32 %v1096, %v1097
        %v1099 = vshll.u32 2131351028, %v1090
        %v1100 = vshrl.u32 2102212464, %v1091
        %v1101 = vor.u32 %v1099, %v1100
        %v1102 = vshll.u32 2102212464, %v1090
        %v1103 = vshrl.u32 920167782, %v1091
        %v1104 = vor.u32 %v1102, %v1103
        %v1105 = vshll.u32 920167782, %v1090
        %v1106 = vshrl.u32 1326507024, %v1091
        %v1107 = vor.u32 %v1105, %v1106
        %vm1108 = vcmp.lt.s32.totalorder %v1089, 1
        %vm1109 = vcmp.lt.s32.totalorder %v1089, 2
        %vm1110 = vcmp.lt.s32.totalorder %v1089, 3
        %vm1111 = vcmp.lt.s32.totalorder %v1089, 4
        %v1112 = vsel %vm1108, %v1092, %v1095
        %v1113 = vsel %vm1111, %v1101, 2102212464
        %v1114 = vsel %vm1110, %v1098, %v1113
        %v1115 = vsel %vm1109, %v1112, %v1114
        %v1116 = vsel %vm1108, %v1095, %v1098
        %v1117 = vsel %vm1111, %v1104, 920167782
        %v1118 = vsel %vm1110, %v1101, %v1117
        %v1119 = vsel %vm1109, %v1116, %v1118
        %v1120 = vsel %vm1108, %v1098, %v1101
        %v1121 = vsel %vm1111, %v1107, 1326507024
        %v1122 = vsel %vm1110, %v1104, %v1121
        %v1123 = vsel %vm1109, %v1120, %v1122
        %v1124 = vshll.u32 %v1084, 8
        %v1125 = vmul.u32.u64.compose %v1124, %v1123
        %v1126 = vextract.low.u32 %v1125
        %v1127 = vextract.high.u32 %v1125
        %v1128 = vmul.u32.u64.compose %v1124, %v1119
        %v1129 = vextract.low.u32 %v1128
        %v1130 = vextract.high.u32 %v1128
        %v1131 = vmul.u32 %v1124, %v1115
        %v1132 = vadd.s32 %v1127, %v1129
        %vm1133 = vc.u32 %v1127, %v1129
        %v1134 = vadd.s32 %v1130, 1
        %v1135 = vsel %vm1133, %v1134, %v1130
        %v1136 = vadd.s32 %v1131, %v1135
        %v1137 = vadd.s32 %v1136, 536870912
        %v1138 = vshrl.u32 %v1137, 30
        %v1139 = vshll.u32 %v1138, 30
        %v1140 = vsub.s32 %v1136, %v1139
        %vm1141 = vcmp.lt.s32.totalorder %v1140, 0
        %v1142 = vsub.s32 0, %v1140
        %v1143 = vsel %vm1141, %v1142, %v1140
        %v1144 = vclz %v1143
        %v1145 = vsub.s32 %v1144, 2
        %vm1146 = vcmp.gt.s32.totalorder 0, %v1145
        %v1147 = vsel %vm1146, 0, %v1145
        %v1148 = vsub.s32 32, %v1147
        %v1149 = vshll.u32 %v1140, %v1147
        %v1150 = vshrl.u32 %v1132, %v1148
        %v1151 = vor.u32 %v1149, %v1150
        %v1152 = vsub.s32 4294967266, %v1147
        %v1153 = vadd.s32 %v1152, 127
        %v1154 = vshll.u32 %v1153, 23
        %v1155 = vor.u32 4788187, %v1154
        %v1156 = vand.u32 2147483647, %v1155
        %v1158 = vcvt.s32.f32 %v1151
        %v1159 = vmul.f32 %v1158, %v1156
        %v1160 = vxor.u32 %v1159, 2147483648
        %v1161 = vsel %vm1078, %v1160, %v1159
        %v1162 = vsub.s32 4, %v1138
        %v1163 = vsel %vm1078, %v1162, %v1138
        %v1164 = vsel %vm1077, %v961, %v1161
        %v1165 = vsel %vm1077, 0, %v1163
        %v1166 = vcosq.f32.pop %v1164
        %v1167 = vsinq.f32.pop %v1164
        %vm1168 = vweird.f32 %v961
        %v1169 = vadd.s32 %v1165, 3
        %v1170 = vand.u32 %v1169, 3
        %vm1171 = vcmp.lt.s32.totalorder %v1170, 2
        %vm1172 = vcmp.eq.s32.totalorder %v1170, 0
        %v1173 = vxor.u32 %v1167, 2147483648
        %v1174 = vsel %vm1172, %v1166, %v1173
        %vm1175 = vcmp.eq.s32.totalorder %v1170, 2
        %v1176 = vxor.u32 %v1166, 2147483648
        %v1177 = vsel %vm1175, %v1176, %v1167
        %v1178 = vsel %vm1171, %v1174, %v1177
        %v1179 = vsel %vm1168, nan, %v1178
        %v1180 = vand.u32 2147483647, %v966
        %vm1181 = vcmp.le.f32.partialorder %v1180, 0.7853982
        %vm1182 = vcmp.lt.s32.totalorder %v966, 0
        %v1183 = vand.u32 %v966, 2139095040
        %v1184 = vshrl.u32 %v1183, 23
        %v1185 = vsub.s32 %v1184, 127
        %v1186 = vand.u32 2147483647, %v966
        %v1187 = vand.u32 %v1186, 8388607
        %v1188 = vor.u32 %v1187, 8388608
        %v1189 = vsub.s32 0, %v1188
        %v1190 = vadd.s32 %v1185, 1
        %vm1191 = vcmp.gt.s32.totalorder %v1190, 0
        %v1192 = vsel %vm1191, %v1190, 0
        %v1193 = vshrl.u32 %v1192, 5
        %v1194 = vand.u32 %v1192, 31
        %v1195 = vsub.s32 32, %v1194
        %v1196 = vshrl.u32 683565275, %v1195
        %v1197 = vshll.u32 683565275, %v1194
        %v1198 = vshrl.u32 2475754826, %v1195
        %v1199 = vor.u32 %v1197, %v1198
        %v1200 = vshll.u32 2475754826, %v1194
        %v1201 = vshrl.u32 2131351028, %v1195
        %v1202 = vor.u32 %v1200, %v1201
        %v1203 = vshll.u32 2131351028, %v1194
        %v1204 = vshrl.u32 2102212464, %v1195
        %v1205 = vor.u32 %v1203, %v1204
        %v1206 = vshll.u32 2102212464, %v1194
        %v1207 = vshrl.u32 920167782, %v1195
        %v1208 = vor.u32 %v1206, %v1207
        %v1209 = vshll.u32 920167782, %v1194
        %v1210 = vshrl.u32 1326507024, %v1195
        %v1211 = vor.u32 %v1209, %v1210
        %vm1212 = vcmp.lt.s32.totalorder %v1193, 1
        %vm1213 = vcmp.lt.s32.totalorder %v1193, 2
        %vm1214 = vcmp.lt.s32.totalorder %v1193, 3
        %vm1215 = vcmp.lt.s32.totalorder %v1193, 4
        %v1216 = vsel %vm1212, %v1196, %v1199
        %v1217 = vsel %vm1215, %v1205, 2102212464
        %v1218 = vsel %vm1214, %v1202, %v1217
        %v1219 = vsel %vm1213, %v1216, %v1218
        %v1220 = vsel %vm1212, %v1199, %v1202
        %v1221 = vsel %vm1215, %v1208, 920167782
        %v1222 = vsel %vm1214, %v1205, %v1221
        %v1223 = vsel %vm1213, %v1220, %v1222
        %v1224 = vsel %vm1212, %v1202, %v1205
        %v1225 = vsel %vm1215, %v1211, 1326507024
        %v1226 = vsel %vm1214, %v1208, %v1225
        %v1227 = vsel %vm1213, %v1224, %v1226
        %v1228 = vshll.u32 %v1188, 8
        %v1229 = vmul.u32.u64.compose %v1228, %v1227
        %v1230 = vextract.low.u32 %v1229
        %v1231 = vextract.high.u32 %v1229
        %v1232 = vmul.u32.u64.compose %v1228, %v1223
        %v1233 = vextract.low.u32 %v1232
        %v1234 = vextract.high.u32 %v1232
        %v1235 = vmul.u32 %v1228, %v1219
        %v1236 = vadd.s32 %v1231, %v1233
        %vm1237 = vc.u32 %v1231, %v1233
        %v1238 = vadd.s32 %v1234, 1
        %v1239 = vsel %vm1237, %v1238, %v1234
        %v1240 = vadd.s32 %v1235, %v1239
        %v1241 = vadd.s32 %v1240, 536870912
        %v1242 = vshrl.u32 %v1241, 30
        %v1243 = vshll.u32 %v1242, 30
        %v1244 = vsub.s32 %v1240, %v1243
        %vm1245 = vcmp.lt.s32.totalorder %v1244, 0
        %v1246 = vsub.s32 0, %v1244
        %v1247 = vsel %vm1245, %v1246, %v1244
        %v1248 = vclz %v1247
        %v1249 = vsub.s32 %v1248, 2
        %vm1250 = vcmp.gt.s32.totalorder 0, %v1249
        %v1251 = vsel %vm1250, 0, %v1249
        %v1252 = vsub.s32 32, %v1251
        %v1253 = vshll.u32 %v1244, %v1251
        %v1254 = vshrl.u32 %v1236, %v1252
        %v1255 = vor.u32 %v1253, %v1254
        %v1256 = vsub.s32 4294967266, %v1251
        %v1257 = vadd.s32 %v1256, 127
        %v1258 = vshll.u32 %v1257, 23
        %v1259 = vor.u32 4788187, %v1258
        %v1260 = vand.u32 2147483647, %v1259
        %v1262 = vcvt.s32.f32 %v1255
        %v1263 = vmul.f32 %v1262, %v1260
        %v1264 = vxor.u32 %v1263, 2147483648
        %v1265 = vsel %vm1182, %v1264, %v1263
        %v1266 = vsub.s32 4, %v1242
        %v1267 = vsel %vm1182, %v1266, %v1242
        %v1268 = vsel %vm1181, %v966, %v1265
        %v1269 = vsel %vm1181, 0, %v1267
        %v1270 = vcosq.f32.pop %v1268
        %v1271 = vsinq.f32.pop %v1268
        %vm1272 = vweird.f32 %v966
        %v1273 = vadd.s32 %v1269, 3
        %v1274 = vand.u32 %v1273, 3
        %vm1275 = vcmp.lt.s32.totalorder %v1274, 2
        %vm1276 = vcmp.eq.s32.totalorder %v1274, 0
        %v1277 = vxor.u32 %v1271, 2147483648
        %v1278 = vsel %vm1276, %v1270, %v1277
        %vm1279 = vcmp.eq.s32.totalorder %v1274, 2
        %v1280 = vxor.u32 %v1270, 2147483648
        %v1281 = vsel %vm1279, %v1280, %v1271
        %v1282 = vsel %vm1275, %v1278, %v1281
        %v1283 = vsel %vm1272, nan, %v1282
        %v1284 = vand.u32 2147483647, %v969
        %vm1285 = vcmp.le.f32.partialorder %v1284, 0.7853982
        %vm1286 = vcmp.lt.s32.totalorder %v969, 0
        %v1287 = vand.u32 %v969, 2139095040
        %v1288 = vshrl.u32 %v1287, 23
        %v1289 = vsub.s32 %v1288, 127
        %v1290 = vand.u32 2147483647, %v969
        %v1291 = vand.u32 %v1290, 8388607
        %v1292 = vor.u32 %v1291, 8388608
        %v1293 = vsub.s32 0, %v1292
        %v1294 = vadd.s32 %v1289, 1
        %vm1295 = vcmp.gt.s32.totalorder %v1294, 0
        %v1296 = vsel %vm1295, %v1294, 0
        %v1297 = vshrl.u32 %v1296, 5
        %v1298 = vand.u32 %v1296, 31
        %v1299 = vsub.s32 32, %v1298
        %v1300 = vshrl.u32 683565275, %v1299
        %v1301 = vshll.u32 683565275, %v1298
        %v1302 = vshrl.u32 2475754826, %v1299
        %v1303 = vor.u32 %v1301, %v1302
        %v1304 = vshll.u32 2475754826, %v1298
        %v1305 = vshrl.u32 2131351028, %v1299
        %v1306 = vor.u32 %v1304, %v1305
        %v1307 = vshll.u32 2131351028, %v1298
        %v1308 = vshrl.u32 2102212464, %v1299
        %v1309 = vor.u32 %v1307, %v1308
        %v1310 = vshll.u32 2102212464, %v1298
        %v1311 = vshrl.u32 920167782, %v1299
        %v1312 = vor.u32 %v1310, %v1311
        %v1313 = vshll.u32 920167782, %v1298
        %v1314 = vshrl.u32 1326507024, %v1299
        %v1315 = vor.u32 %v1313, %v1314
        %vm1316 = vcmp.lt.s32.totalorder %v1297, 1
        %vm1317 = vcmp.lt.s32.totalorder %v1297, 2
        %vm1318 = vcmp.lt.s32.totalorder %v1297, 3
        %vm1319 = vcmp.lt.s32.totalorder %v1297, 4
        %v1320 = vsel %vm1316, %v1300, %v1303
        %v1321 = vsel %vm1319, %v1309, 2102212464
        %v1322 = vsel %vm1318, %v1306, %v1321
        %v1323 = vsel %vm1317, %v1320, %v1322
        %v1324 = vsel %vm1316, %v1303, %v1306
        %v1325 = vsel %vm1319, %v1312, 920167782
        %v1326 = vsel %vm1318, %v1309, %v1325
        %v1327 = vsel %vm1317, %v1324, %v1326
        %v1328 = vsel %vm1316, %v1306, %v1309
        %v1329 = vsel %vm1319, %v1315, 1326507024
        %v1330 = vsel %vm1318, %v1312, %v1329
        %v1331 = vsel %vm1317, %v1328, %v1330
        %v1332 = vshll.u32 %v1292, 8
        %v1333 = vmul.u32.u64.compose %v1332, %v1331
        %v1334 = vextract.low.u32 %v1333
        %v1335 = vextract.high.u32 %v1333
        %v1336 = vmul.u32.u64.compose %v1332, %v1327
        %v1337 = vextract.low.u32 %v1336
        %v1338 = vextract.high.u32 %v1336
        %v1339 = vmul.u32 %v1332, %v1323
        %v1340 = vadd.s32 %v1335, %v1337
        %vm1341 = vc.u32 %v1335, %v1337
        %v1342 = vadd.s32 %v1338, 1
        %v1343 = vsel %vm1341, %v1342, %v1338
        %v1344 = vadd.s32 %v1339, %v1343
        %v1345 = vadd.s32 %v1344, 536870912
        %v1346 = vshrl.u32 %v1345, 30
        %v1347 = vshll.u32 %v1346, 30
        %v1348 = vsub.s32 %v1344, %v1347
        %vm1349 = vcmp.lt.s32.totalorder %v1348, 0
        %v1350 = vsub.s32 0, %v1348
        %v1351 = vsel %vm1349, %v1350, %v1348
        %v1352 = vclz %v1351
        %v1353 = vsub.s32 %v1352, 2
        %vm1354 = vcmp.gt.s32.totalorder 0, %v1353
        %v1355 = vsel %vm1354, 0, %v1353
        %v1356 = vsub.s32 32, %v1355
        %v1357 = vshll.u32 %v1348, %v1355
        %v1358 = vshrl.u32 %v1340, %v1356
        %v1359 = vor.u32 %v1357, %v1358
        %v1360 = vsub.s32 4294967266, %v1355
        %v1361 = vadd.s32 %v1360, 127
        %v1362 = vshll.u32 %v1361, 23
        %v1363 = vor.u32 4788187, %v1362
        %v1364 = vand.u32 2147483647, %v1363
        %v1366 = vcvt.s32.f32 %v1359
        %v1367 = vmul.f32 %v1366, %v1364
        %v1368 = vxor.u32 %v1367, 2147483648
        %v1369 = vsel %vm1286, %v1368, %v1367
        %v1370 = vsub.s32 4, %v1346
        %v1371 = vsel %vm1286, %v1370, %v1346
        %v1372 = vsel %vm1285, %v969, %v1369
        %v1373 = vsel %vm1285, 0, %v1371
        %v1374 = vcosq.f32.pop %v1372
        %v1375 = vsinq.f32.pop %v1372
        %vm1376 = vweird.f32 %v969
        %v1377 = vadd.s32 %v1373, 3
        %v1378 = vand.u32 %v1377, 3
        %vm1379 = vcmp.lt.s32.totalorder %v1378, 2
        %vm1380 = vcmp.eq.s32.totalorder %v1378, 0
        %v1381 = vxor.u32 %v1375, 2147483648
        %v1382 = vsel %vm1380, %v1374, %v1381
        %vm1383 = vcmp.eq.s32.totalorder %v1378, 2
        %v1384 = vxor.u32 %v1374, 2147483648
        %v1385 = vsel %vm1383, %v1384, %v1375
        %v1386 = vsel %vm1379, %v1382, %v1385
        %v1387 = vsel %vm1376, nan, %v1386
        %v1388 = vpack.c.bf16 %v1179, %v1075
        %v1389 = vpack.c.bf16 %v1387, %v1283
        %v1390 = vld [vmem:[#allocation2] sm:$0xf]
        %v1391 = vld [vmem:[#allocation2 + $0x4] sm:$0xf]
        %v1392 = vld [vmem:[#allocation2 + $0x8] sm:$0xf]
        %v1393 = vld [vmem:[#allocation2 + $0xc] sm:$0xf]
        %v1394 = vld [vmem:[#allocation2 + $0x10] sm:$0xf]
        %v1395 = vld [vmem:[#allocation2 + $0x14] sm:$0xf]
        %v1396 = vld [vmem:[#allocation2 + $0x18] sm:$0xf]
        %v1397 = vld [vmem:[#allocation2 + $0x1c] sm:$0xf]
        %v1398 = vld [vmem:[#allocation2 + $0x20] sm:$0xf]
        %v1399 = vld [vmem:[#allocation2 + $0x24] sm:$0xf]
        %v1400 = vld [vmem:[#allocation2 + $0x28] sm:$0xf]
        %v1401 = vld [vmem:[#allocation2 + $0x2c] sm:$0xf]
        %v1402 = vld [vmem:[#allocation2 + $0x30] sm:$0xf]
        %v1403 = vld [vmem:[#allocation2 + $0x34] sm:$0xf]
        %v1404 = vld [vmem:[#allocation2 + $0x38] sm:$0xf]
        %v1405 = vld [vmem:[#allocation2 + $0x3c] sm:$0xf]
        %v1406 = vld [vmem:[%s6] sm:$0x1]
        %v1408 = vlaneseq
        %v1409 = vshrl.u32 %v1408, 7
        %v1410 = vsub.s32 0, %v1409
        %v1411 = vrot.slane %v1406, %v1410
        %v1429 = vunpack.c.l.b16 %v1390
        %v1430 = vunpack.c.l.b16 %v1391
        %v1431 = vunpack.c.l.b16 %v1392
        %v1432 = vunpack.c.l.b16 %v1393
        %v1433 = vunpack.c.l.b16 %v1394
        %v1434 = vunpack.c.l.b16 %v1395
        %v1435 = vunpack.c.l.b16 %v1396
        %v1436 = vunpack.c.l.b16 %v1397
        %v1437 = vunpack.c.l.b16 %v1398
        %v1438 = vunpack.c.l.b16 %v1399
        %v1439 = vunpack.c.l.b16 %v1400
        %v1440 = vunpack.c.l.b16 %v1401
        %v1441 = vunpack.c.l.b16 %v1402
        %v1442 = vunpack.c.l.b16 %v1403
        %v1443 = vunpack.c.l.b16 %v1404
        %v1444 = vunpack.c.l.b16 %v1405
        %v1445 = vpack.c.b16 %v1430, %v1429
        %v1446 = vpack.c.b16 %v1432, %v1431
        %v1447 = vpack.c.b16 %v1434, %v1433
        %v1448 = vpack.c.b16 %v1436, %v1435
        %v1449 = vpack.c.b16 %v1438, %v1437
        %v1450 = vpack.c.b16 %v1440, %v1439
        %v1451 = vpack.c.b16 %v1442, %v1441
        %v1452 = vpack.c.b16 %v1444, %v1443
        %1461 = vmatprep.subr.bf16.mxu0 0
        %1462 = vmatpush1.bf16.msra.mxu0 %v1445
        %1463 = vmatprep.subr.bf16.mxu0 0
        %1464 = vmatpush1.bf16.msra.mxu0 %v1446
        %1465 = vmatprep.subr.bf16.mxu0 0
        %1466 = vmatpush1.bf16.msra.mxu0 %v1447
        %1467 = vmatprep.subr.bf16.mxu0 0
        %1468 = vmatpush1.bf16.msra.mxu0 %v1448
        %1469 = vmatprep.subr.bf16.mxu0 0
        %1470 = vmatpush1.bf16.msra.mxu0 %v1449
        %1471 = vmatprep.subr.bf16.mxu0 0
        %1472 = vmatpush1.bf16.msra.mxu0 %v1450
        %1473 = vmatprep.subr.bf16.mxu0 0
        %1474 = vmatpush1.bf16.msra.mxu0 %v1451
        %1475 = vmatprep.subr.bf16.mxu0 0
        %1476 = vmatpush1.bf16.msra.mxu0 %v1452
        %1477 = vmatprep.subr.bf16.mxu0 0
        %1478 = vmatpush1.bf16.msra.mxu0 0
        %1479 = vmatprep.subr.bf16.mxu0 0
        %1480 = vmatpush1.bf16.msra.mxu0 0
        %1481 = vmatprep.subr.bf16.mxu0 0
        %1482 = vmatpush1.bf16.msra.mxu0 0
        %1483 = vmatprep.subr.bf16.mxu0 0
        %1484 = vmatpush1.bf16.msra.mxu0 0
        %1485 = vmatprep.subr.bf16.mxu0 0
        %1486 = vmatpush1.bf16.msra.mxu0 0
        %1487 = vmatprep.subr.bf16.mxu0 0
        %1488 = vmatpush1.bf16.msra.mxu0 0
        %1489 = vmatprep.subr.bf16.mxu0 0
        %1490 = vmatpush1.bf16.msra.mxu0 0
        %1491 = vmatprep.subr.bf16.mxu0 0
        %1492 = vmatpush1.bf16.msra.mxu0 0
        %1493 = vmatprep.mubr.bf16.mxu0 0
        %1494 = vmatmul.mubr.bf16.gmra.mrb[0].mxu0 %v1388
        %v1495 = vpop.f32.mrb[0].mxu0
        %v1496 = vadd.f32 %v1411, %v1495
        %v1497 = vpop.f32.mrb[0].mxu0
        %v1498 = vpop.f32.mrb[0].mxu0
        %v1499 = vadd.f32 %v1411, %v1498
        %v1500 = vpop.f32.mrb[0].mxu0
        %1501 = vmatprep.mubr.bf16.mxu0 0
        %1502 = vmatmul.mubr.bf16.gmra.mrb[0].mxu0 %v1389
        %v1503 = vpop.f32.mrb[0].mxu0
        %v1504 = vadd.f32 %v1411, %v1503
        %v1505 = vpop.f32.mrb[0].mxu0
        %v1506 = vpop.f32.mrb[0].mxu0
        %v1507 = vadd.f32 %v1411, %v1506
        %v1508 = vpop.f32.mrb[0].mxu0
        %1509 = vdwg.mxu0
        %v1510 = vand.u32 2147483647, %v1496
        %vm1511 = vcmp.le.f32.partialorder %v1510, 0.7853982
        %vm1512 = vcmp.lt.s32.totalorder %v1496, 0
        %v1513 = vand.u32 %v1496, 2139095040
        %v1514 = vshrl.u32 %v1513, 23
        %v1515 = vsub.s32 %v1514, 127
        %v1516 = vand.u32 2147483647, %v1496
        %v1517 = vand.u32 %v1516, 8388607
        %v1518 = vor.u32 %v1517, 8388608
        %v1519 = vsub.s32 0, %v1518
        %v1520 = vadd.s32 %v1515, 1
        %vm1521 = vcmp.gt.s32.totalorder %v1520, 0
        %v1522 = vsel %vm1521, %v1520, 0
        %v1523 = vshrl.u32 %v1522, 5
        %v1524 = vand.u32 %v1522, 31
        %v1525 = vsub.s32 32, %v1524
        %v1526 = vshrl.u32 683565275, %v1525
        %v1527 = vshll.u32 683565275, %v1524
        %v1528 = vshrl.u32 2475754826, %v1525
        %v1529 = vor.u32 %v1527, %v1528
        %v1530 = vshll.u32 2475754826, %v1524
        %v1531 = vshrl.u32 2131351028, %v1525
        %v1532 = vor.u32 %v1530, %v1531
        %v1533 = vshll.u32 2131351028, %v1524
        %v1534 = vshrl.u32 2102212464, %v1525
        %v1535 = vor.u32 %v1533, %v1534
        %v1536 = vshll.u32 2102212464, %v1524
        %v1537 = vshrl.u32 920167782, %v1525
        %v1538 = vor.u32 %v1536, %v1537
        %v1539 = vshll.u32 920167782, %v1524
        %v1540 = vshrl.u32 1326507024, %v1525
        %v1541 = vor.u32 %v1539, %v1540
        %vm1542 = vcmp.lt.s32.totalorder %v1523, 1
        %vm1543 = vcmp.lt.s32.totalorder %v1523, 2
        %vm1544 = vcmp.lt.s32.totalorder %v1523, 3
        %vm1545 = vcmp.lt.s32.totalorder %v1523, 4
        %v1546 = vsel %vm1542, %v1526, %v1529
        %v1547 = vsel %vm1545, %v1535, 2102212464
        %v1548 = vsel %vm1544, %v1532, %v1547
        %v1549 = vsel %vm1543, %v1546, %v1548
        %v1550 = vsel %vm1542, %v1529, %v1532
        %v1551 = vsel %vm1545, %v1538, 920167782
        %v1552 = vsel %vm1544, %v1535, %v1551
        %v1553 = vsel %vm1543, %v1550, %v1552
        %v1554 = vsel %vm1542, %v1532, %v1535
        %v1555 = vsel %vm1545, %v1541, 1326507024
        %v1556 = vsel %vm1544, %v1538, %v1555
        %v1557 = vsel %vm1543, %v1554, %v1556
        %v1558 = vshll.u32 %v1518, 8
        %v1559 = vmul.u32.u64.compose %v1558, %v1557
        %v1560 = vextract.low.u32 %v1559
        %v1561 = vextract.high.u32 %v1559
        %v1562 = vmul.u32.u64.compose %v1558, %v1553
        %v1563 = vextract.low.u32 %v1562
        %v1564 = vextract.high.u32 %v1562
        %v1565 = vmul.u32 %v1558, %v1549
        %v1566 = vadd.s32 %v1561, %v1563
        %vm1567 = vc.u32 %v1561, %v1563
        %v1568 = vadd.s32 %v1564, 1
        %v1569 = vsel %vm1567, %v1568, %v1564
        %v1570 = vadd.s32 %v1565, %v1569
        %v1571 = vadd.s32 %v1570, 536870912
        %v1572 = vshrl.u32 %v1571, 30
        %v1573 = vshll.u32 %v1572, 30
        %v1574 = vsub.s32 %v1570, %v1573
        %vm1575 = vcmp.lt.s32.totalorder %v1574, 0
        %v1576 = vsub.s32 0, %v1574
        %v1577 = vsel %vm1575, %v1576, %v1574
        %v1578 = vclz %v1577
        %v1579 = vsub.s32 %v1578, 2
        %vm1580 = vcmp.gt.s32.totalorder 0, %v1579
        %v1581 = vsel %vm1580, 0, %v1579
        %v1582 = vsub.s32 32, %v1581
        %v1583 = vshll.u32 %v1574, %v1581
        %v1584 = vshrl.u32 %v1566, %v1582
        %v1585 = vor.u32 %v1583, %v1584
        %v1586 = vsub.s32 4294967266, %v1581
        %v1587 = vadd.s32 %v1586, 127
        %v1588 = vshll.u32 %v1587, 23
        %v1589 = vor.u32 4788187, %v1588
        %v1590 = vand.u32 2147483647, %v1589
        %v1592 = vcvt.s32.f32 %v1585
        %v1593 = vmul.f32 %v1592, %v1590
        %v1594 = vxor.u32 %v1593, 2147483648
        %v1595 = vsel %vm1512, %v1594, %v1593
        %v1596 = vsub.s32 4, %v1572
        %v1597 = vsel %vm1512, %v1596, %v1572
        %v1598 = vsel %vm1511, %v1496, %v1595
        %v1599 = vsel %vm1511, 0, %v1597
        %v1600 = vcosq.f32.pop %v1598
        %v1601 = vsinq.f32.pop %v1598
        %vm1602 = vweird.f32 %v1496
        %v1603 = vadd.s32 %v1599, 3
        %v1604 = vand.u32 %v1603, 3
        %vm1605 = vcmp.lt.s32.totalorder %v1604, 2
        %vm1606 = vcmp.eq.s32.totalorder %v1604, 0
        %v1607 = vxor.u32 %v1601, 2147483648
        %v1608 = vsel %vm1606, %v1600, %v1607
        %vm1609 = vcmp.eq.s32.totalorder %v1604, 2
        %v1610 = vxor.u32 %v1600, 2147483648
        %v1611 = vsel %vm1609, %v1610, %v1601
        %v1612 = vsel %vm1605, %v1608, %v1611
        %v1613 = vsel %vm1602, nan, %v1612
        %v1614 = vand.u32 2147483647, %v1499
        %vm1615 = vcmp.le.f32.partialorder %v1614, 0.7853982
        %vm1616 = vcmp.lt.s32.totalorder %v1499, 0
        %v1617 = vand.u32 %v1499, 2139095040
        %v1618 = vshrl.u32 %v1617, 23
        %v1619 = vsub.s32 %v1618, 127
        %v1620 = vand.u32 2147483647, %v1499
        %v1621 = vand.u32 %v1620, 8388607
        %v1622 = vor.u32 %v1621, 8388608
        %v1623 = vsub.s32 0, %v1622
        %v1624 = vadd.s32 %v1619, 1
        %vm1625 = vcmp.gt.s32.totalorder %v1624, 0
        %v1626 = vsel %vm1625, %v1624, 0
        %v1627 = vshrl.u32 %v1626, 5
        %v1628 = vand.u32 %v1626, 31
        %v1629 = vsub.s32 32, %v1628
        %v1630 = vshrl.u32 683565275, %v1629
        %v1631 = vshll.u32 683565275, %v1628
        %v1632 = vshrl.u32 2475754826, %v1629
        %v1633 = vor.u32 %v1631, %v1632
        %v1634 = vshll.u32 2475754826, %v1628
        %v1635 = vshrl.u32 2131351028, %v1629
        %v1636 = vor.u32 %v1634, %v1635
        %v1637 = vshll.u32 2131351028, %v1628
        %v1638 = vshrl.u32 2102212464, %v1629
        %v1639 = vor.u32 %v1637, %v1638
        %v1640 = vshll.u32 2102212464, %v1628
        %v1641 = vshrl.u32 920167782, %v1629
        %v1642 = vor.u32 %v1640, %v1641
        %v1643 = vshll.u32 920167782, %v1628
        %v1644 = vshrl.u32 1326507024, %v1629
        %v1645 = vor.u32 %v1643, %v1644
        %vm1646 = vcmp.lt.s32.totalorder %v1627, 1
        %vm1647 = vcmp.lt.s32.totalorder %v1627, 2
        %vm1648 = vcmp.lt.s32.totalorder %v1627, 3
        %vm1649 = vcmp.lt.s32.totalorder %v1627, 4
        %v1650 = vsel %vm1646, %v1630, %v1633
        %v1651 = vsel %vm1649, %v1639, 2102212464
        %v1652 = vsel %vm1648, %v1636, %v1651
        %v1653 = vsel %vm1647, %v1650, %v1652
        %v1654 = vsel %vm1646, %v1633, %v1636
        %v1655 = vsel %vm1649, %v1642, 920167782
        %v1656 = vsel %vm1648, %v1639, %v1655
        %v1657 = vsel %vm1647, %v1654, %v1656
        %v1658 = vsel %vm1646, %v1636, %v1639
        %v1659 = vsel %vm1649, %v1645, 1326507024
        %v1660 = vsel %vm1648, %v1642, %v1659
        %v1661 = vsel %vm1647, %v1658, %v1660
        %v1662 = vshll.u32 %v1622, 8
        %v1663 = vmul.u32.u64.compose %v1662, %v1661
        %v1664 = vextract.low.u32 %v1663
        %v1665 = vextract.high.u32 %v1663
        %v1666 = vmul.u32.u64.compose %v1662, %v1657
        %v1667 = vextract.low.u32 %v1666
        %v1668 = vextract.high.u32 %v1666
        %v1669 = vmul.u32 %v1662, %v1653
        %v1670 = vadd.s32 %v1665, %v1667
        %vm1671 = vc.u32 %v1665, %v1667
        %v1672 = vadd.s32 %v1668, 1
        %v1673 = vsel %vm1671, %v1672, %v1668
        %v1674 = vadd.s32 %v1669, %v1673
        %v1675 = vadd.s32 %v1674, 536870912
        %v1676 = vshrl.u32 %v1675, 30
        %v1677 = vshll.u32 %v1676, 30
        %v1678 = vsub.s32 %v1674, %v1677
        %vm1679 = vcmp.lt.s32.totalorder %v1678, 0
        %v1680 = vsub.s32 0, %v1678
        %v1681 = vsel %vm1679, %v1680, %v1678
        %v1682 = vclz %v1681
        %v1683 = vsub.s32 %v1682, 2
        %vm1684 = vcmp.gt.s32.totalorder 0, %v1683
        %v1685 = vsel %vm1684, 0, %v1683
        %v1686 = vsub.s32 32, %v1685
        %v1687 = vshll.u32 %v1678, %v1685
        %v1688 = vshrl.u32 %v1670, %v1686
        %v1689 = vor.u32 %v1687, %v1688
        %v1690 = vsub.s32 4294967266, %v1685
        %v1691 = vadd.s32 %v1690, 127
        %v1692 = vshll.u32 %v1691, 23
        %v1693 = vor.u32 4788187, %v1692
        %v1694 = vand.u32 2147483647, %v1693
        %v1696 = vcvt.s32.f32 %v1689
        %v1697 = vmul.f32 %v1696, %v1694
        %v1698 = vxor.u32 %v1697, 2147483648
        %v1699 = vsel %vm1616, %v1698, %v1697
        %v1700 = vsub.s32 4, %v1676
        %v1701 = vsel %vm1616, %v1700, %v1676
        %v1702 = vsel %vm1615, %v1499, %v1699
        %v1703 = vsel %vm1615, 0, %v1701
        %v1704 = vcosq.f32.pop %v1702
        %v1705 = vsinq.f32.pop %v1702
        %vm1706 = vweird.f32 %v1499
        %v1707 = vadd.s32 %v1703, 3
        %v1708 = vand.u32 %v1707, 3
        %vm1709 = vcmp.lt.s32.totalorder %v1708, 2
        %vm1710 = vcmp.eq.s32.totalorder %v1708, 0
        %v1711 = vxor.u32 %v1705, 2147483648
        %v1712 = vsel %vm1710, %v1704, %v1711
        %vm1713 = vcmp.eq.s32.totalorder %v1708, 2
        %v1714 = vxor.u32 %v1704, 2147483648
        %v1715 = vsel %vm1713, %v1714, %v1705
        %v1716 = vsel %vm1709, %v1712, %v1715
        %v1717 = vsel %vm1706, nan, %v1716
        %v1718 = vand.u32 2147483647, %v1504
        %vm1719 = vcmp.le.f32.partialorder %v1718, 0.7853982
        %vm1720 = vcmp.lt.s32.totalorder %v1504, 0
        %v1721 = vand.u32 %v1504, 2139095040
        %v1722 = vshrl.u32 %v1721, 23
        %v1723 = vsub.s32 %v1722, 127
        %v1724 = vand.u32 2147483647, %v1504
        %v1725 = vand.u32 %v1724, 8388607
        %v1726 = vor.u32 %v1725, 8388608
        %v1727 = vsub.s32 0, %v1726
        %v1728 = vadd.s32 %v1723, 1
        %vm1729 = vcmp.gt.s32.totalorder %v1728, 0
        %v1730 = vsel %vm1729, %v1728, 0
        %v1731 = vshrl.u32 %v1730, 5
        %v1732 = vand.u32 %v1730, 31
        %v1733 = vsub.s32 32, %v1732
        %v1734 = vshrl.u32 683565275, %v1733
        %v1735 = vshll.u32 683565275, %v1732
        %v1736 = vshrl.u32 2475754826, %v1733
        %v1737 = vor.u32 %v1735, %v1736
        %v1738 = vshll.u32 2475754826, %v1732
        %v1739 = vshrl.u32 2131351028, %v1733
        %v1740 = vor.u32 %v1738, %v1739
        %v1741 = vshll.u32 2131351028, %v1732
        %v1742 = vshrl.u32 2102212464, %v1733
        %v1743 = vor.u32 %v1741, %v1742
        %v1744 = vshll.u32 2102212464, %v1732
        %v1745 = vshrl.u32 920167782, %v1733
        %v1746 = vor.u32 %v1744, %v1745
        %v1747 = vshll.u32 920167782, %v1732
        %v1748 = vshrl.u32 1326507024, %v1733
        %v1749 = vor.u32 %v1747, %v1748
        %vm1750 = vcmp.lt.s32.totalorder %v1731, 1
        %vm1751 = vcmp.lt.s32.totalorder %v1731, 2
        %vm1752 = vcmp.lt.s32.totalorder %v1731, 3
        %vm1753 = vcmp.lt.s32.totalorder %v1731, 4
        %v1754 = vsel %vm1750, %v1734, %v1737
        %v1755 = vsel %vm1753, %v1743, 2102212464
        %v1756 = vsel %vm1752, %v1740, %v1755
        %v1757 = vsel %vm1751, %v1754, %v1756
        %v1758 = vsel %vm1750, %v1737, %v1740
        %v1759 = vsel %vm1753, %v1746, 920167782
        %v1760 = vsel %vm1752, %v1743, %v1759
        %v1761 = vsel %vm1751, %v1758, %v1760
        %v1762 = vsel %vm1750, %v1740, %v1743
        %v1763 = vsel %vm1753, %v1749, 1326507024
        %v1764 = vsel %vm1752, %v1746, %v1763
        %v1765 = vsel %vm1751, %v1762, %v1764
        %v1766 = vshll.u32 %v1726, 8
        %v1767 = vmul.u32.u64.compose %v1766, %v1765
        %v1768 = vextract.low.u32 %v1767
        %v1769 = vextract.high.u32 %v1767
        %v1770 = vmul.u32.u64.compose %v1766, %v1761
        %v1771 = vextract.low.u32 %v1770
        %v1772 = vextract.high.u32 %v1770
        %v1773 = vmul.u32 %v1766, %v1757
        %v1774 = vadd.s32 %v1769, %v1771
        %vm1775 = vc.u32 %v1769, %v1771
        %v1776 = vadd.s32 %v1772, 1
        %v1777 = vsel %vm1775, %v1776, %v1772
        %v1778 = vadd.s32 %v1773, %v1777
        %v1779 = vadd.s32 %v1778, 536870912
        %v1780 = vshrl.u32 %v1779, 30
        %v1781 = vshll.u32 %v1780, 30
        %v1782 = vsub.s32 %v1778, %v1781
        %vm1783 = vcmp.lt.s32.totalorder %v1782, 0
        %v1784 = vsub.s32 0, %v1782
        %v1785 = vsel %vm1783, %v1784, %v1782
        %v1786 = vclz %v1785
        %v1787 = vsub.s32 %v1786, 2
        %vm1788 = vcmp.gt.s32.totalorder 0, %v1787
        %v1789 = vsel %vm1788, 0, %v1787
        %v1790 = vsub.s32 32, %v1789
        %v1791 = vshll.u32 %v1782, %v1789
        %v1792 = vshrl.u32 %v1774, %v1790
        %v1793 = vor.u32 %v1791, %v1792
        %v1794 = vsub.s32 4294967266, %v1789
        %v1795 = vadd.s32 %v1794, 127
        %v1796 = vshll.u32 %v1795, 23
        %v1797 = vor.u32 4788187, %v1796
        %v1798 = vand.u32 2147483647, %v1797
        %v1800 = vcvt.s32.f32 %v1793
        %v1801 = vmul.f32 %v1800, %v1798
        %v1802 = vxor.u32 %v1801, 2147483648
        %v1803 = vsel %vm1720, %v1802, %v1801
        %v1804 = vsub.s32 4, %v1780
        %v1805 = vsel %vm1720, %v1804, %v1780
        %v1806 = vsel %vm1719, %v1504, %v1803
        %v1807 = vsel %vm1719, 0, %v1805
        %v1808 = vcosq.f32.pop %v1806
        %v1809 = vsinq.f32.pop %v1806
        %vm1810 = vweird.f32 %v1504
        %v1811 = vadd.s32 %v1807, 3
        %v1812 = vand.u32 %v1811, 3
        %vm1813 = vcmp.lt.s32.totalorder %v1812, 2
        %vm1814 = vcmp.eq.s32.totalorder %v1812, 0
        %v1815 = vxor.u32 %v1809, 2147483648
        %v1816 = vsel %vm1814, %v1808, %v1815
        %vm1817 = vcmp.eq.s32.totalorder %v1812, 2
        %v1818 = vxor.u32 %v1808, 2147483648
        %v1819 = vsel %vm1817, %v1818, %v1809
        %v1820 = vsel %vm1813, %v1816, %v1819
        %v1821 = vsel %vm1810, nan, %v1820
        %v1822 = vand.u32 2147483647, %v1507
        %vm1823 = vcmp.le.f32.partialorder %v1822, 0.7853982
        %vm1824 = vcmp.lt.s32.totalorder %v1507, 0
        %v1825 = vand.u32 %v1507, 2139095040
        %v1826 = vshrl.u32 %v1825, 23
        %v1827 = vsub.s32 %v1826, 127
        %v1828 = vand.u32 2147483647, %v1507
        %v1829 = vand.u32 %v1828, 8388607
        %v1830 = vor.u32 %v1829, 8388608
        %v1831 = vsub.s32 0, %v1830
        %v1832 = vadd.s32 %v1827, 1
        %vm1833 = vcmp.gt.s32.totalorder %v1832, 0
        %v1834 = vsel %vm1833, %v1832, 0
        %v1835 = vshrl.u32 %v1834, 5
        %v1836 = vand.u32 %v1834, 31
        %v1837 = vsub.s32 32, %v1836
        %v1838 = vshrl.u32 683565275, %v1837
        %v1839 = vshll.u32 683565275, %v1836
        %v1840 = vshrl.u32 2475754826, %v1837
        %v1841 = vor.u32 %v1839, %v1840
        %v1842 = vshll.u32 2475754826, %v1836
        %v1843 = vshrl.u32 2131351028, %v1837
        %v1844 = vor.u32 %v1842, %v1843
        %v1845 = vshll.u32 2131351028, %v1836
        %v1846 = vshrl.u32 2102212464, %v1837
        %v1847 = vor.u32 %v1845, %v1846
        %v1848 = vshll.u32 2102212464, %v1836
        %v1849 = vshrl.u32 920167782, %v1837
        %v1850 = vor.u32 %v1848, %v1849
        %v1851 = vshll.u32 920167782, %v1836
        %v1852 = vshrl.u32 1326507024, %v1837
        %v1853 = vor.u32 %v1851, %v1852
        %vm1854 = vcmp.lt.s32.totalorder %v1835, 1
        %vm1855 = vcmp.lt.s32.totalorder %v1835, 2
        %vm1856 = vcmp.lt.s32.totalorder %v1835, 3
        %vm1857 = vcmp.lt.s32.totalorder %v1835, 4
        %v1858 = vsel %vm1854, %v1838, %v1841
        %v1859 = vsel %vm1857, %v1847, 2102212464
        %v1860 = vsel %vm1856, %v1844, %v1859
        %v1861 = vsel %vm1855, %v1858, %v1860
        %v1862 = vsel %vm1854, %v1841, %v1844
        %v1863 = vsel %vm1857, %v1850, 920167782
        %v1864 = vsel %vm1856, %v1847, %v1863
        %v1865 = vsel %vm1855, %v1862, %v1864
        %v1866 = vsel %vm1854, %v1844, %v1847
        %v1867 = vsel %vm1857, %v1853, 1326507024
        %v1868 = vsel %vm1856, %v1850, %v1867
        %v1869 = vsel %vm1855, %v1866, %v1868
        %v1870 = vshll.u32 %v1830, 8
        %v1871 = vmul.u32.u64.compose %v1870, %v1869
        %v1872 = vextract.low.u32 %v1871
        %v1873 = vextract.high.u32 %v1871
        %v1874 = vmul.u32.u64.compose %v1870, %v1865
        %v1875 = vextract.low.u32 %v1874
        %v1876 = vextract.high.u32 %v1874
        %v1877 = vmul.u32 %v1870, %v1861
        %v1878 = vadd.s32 %v1873, %v1875
        %vm1879 = vc.u32 %v1873, %v1875
        %v1880 = vadd.s32 %v1876, 1
        %v1881 = vsel %vm1879, %v1880, %v1876
        %v1882 = vadd.s32 %v1877, %v1881
        %v1883 = vadd.s32 %v1882, 536870912
        %v1884 = vshrl.u32 %v1883, 30
        %v1885 = vshll.u32 %v1884, 30
        %v1886 = vsub.s32 %v1882, %v1885
        %vm1887 = vcmp.lt.s32.totalorder %v1886, 0
        %v1888 = vsub.s32 0, %v1886
        %v1889 = vsel %vm1887, %v1888, %v1886
        %v1890 = vclz %v1889
        %v1891 = vsub.s32 %v1890, 2
        %vm1892 = vcmp.gt.s32.totalorder 0, %v1891
        %v1893 = vsel %vm1892, 0, %v1891
        %v1894 = vsub.s32 32, %v1893
        %v1895 = vshll.u32 %v1886, %v1893
        %v1896 = vshrl.u32 %v1878, %v1894
        %v1897 = vor.u32 %v1895, %v1896
        %v1898 = vsub.s32 4294967266, %v1893
        %v1899 = vadd.s32 %v1898, 127
        %v1900 = vshll.u32 %v1899, 23
        %v1901 = vor.u32 4788187, %v1900
        %v1902 = vand.u32 2147483647, %v1901
        %v1904 = vcvt.s32.f32 %v1897
        %v1905 = vmul.f32 %v1904, %v1902
        %v1906 = vxor.u32 %v1905, 2147483648
        %v1907 = vsel %vm1824, %v1906, %v1905
        %v1908 = vsub.s32 4, %v1884
        %v1909 = vsel %vm1824, %v1908, %v1884
        %v1910 = vsel %vm1823, %v1507, %v1907
        %v1911 = vsel %vm1823, 0, %v1909
        %v1912 = vcosq.f32.pop %v1910
        %v1913 = vsinq.f32.pop %v1910
        %vm1914 = vweird.f32 %v1507
        %v1915 = vadd.s32 %v1911, 3
        %v1916 = vand.u32 %v1915, 3
        %vm1917 = vcmp.lt.s32.totalorder %v1916, 2
        %vm1918 = vcmp.eq.s32.totalorder %v1916, 0
        %v1919 = vxor.u32 %v1913, 2147483648
        %v1920 = vsel %vm1918, %v1912, %v1919
        %vm1921 = vcmp.eq.s32.totalorder %v1916, 2
        %v1922 = vxor.u32 %v1912, 2147483648
        %v1923 = vsel %vm1921, %v1922, %v1913
        %v1924 = vsel %vm1917, %v1920, %v1923
        %v1925 = vsel %vm1914, nan, %v1924
        %v1926 = vpack.c.bf16 %v1717, %v1613
        %v1927 = vpack.c.bf16 %v1925, %v1821
        %v1928 = vld [vmem:[%s7] sm:$0xf]
        %v1929 = vld [vmem:[%s7 + $0x4] sm:$0xf]
        %v1930 = vld [vmem:[%s7 + $0x8] sm:$0xf]
        %v1931 = vld [vmem:[%s7 + $0xc] sm:$0xf]
        %v1932 = vld [vmem:[%s7 + $0x10] sm:$0xf]
        %v1933 = vld [vmem:[%s7 + $0x14] sm:$0xf]
        %v1934 = vld [vmem:[%s7 + $0x18] sm:$0xf]
        %v1935 = vld [vmem:[%s7 + $0x1c] sm:$0xf]
        %v1936 = vld [vmem:[%s7 + $0x20] sm:$0xf]
        %v1937 = vld [vmem:[%s7 + $0x24] sm:$0xf]
        %v1938 = vld [vmem:[%s7 + $0x28] sm:$0xf]
        %v1939 = vld [vmem:[%s7 + $0x2c] sm:$0xf]
        %v1940 = vld [vmem:[%s7 + $0x30] sm:$0xf]
        %v1941 = vld [vmem:[%s7 + $0x34] sm:$0xf]
        %v1942 = vld [vmem:[%s7 + $0x38] sm:$0xf]
        %v1943 = vld [vmem:[%s7 + $0x3c] sm:$0xf]
        %v1944 = vld [vmem:[%s8] sm:$0x1]
        %v1946 = vlaneseq
        %v1947 = vshrl.u32 %v1946, 7
        %v1948 = vsub.s32 0, %v1947
        %v1949 = vrot.slane %v1944, %v1948
        %v1967 = vunpack.c.l.b16 %v1928
        %v1968 = vunpack.c.l.b16 %v1929
        %v1969 = vunpack.c.l.b16 %v1930
        %v1970 = vunpack.c.l.b16 %v1931
        %v1971 = vunpack.c.l.b16 %v1932
        %v1972 = vunpack.c.l.b16 %v1933
        %v1973 = vunpack.c.l.b16 %v1934
        %v1974 = vunpack.c.l.b16 %v1935
        %v1975 = vunpack.c.l.b16 %v1936
        %v1976 = vunpack.c.l.b16 %v1937
        %v1977 = vunpack.c.l.b16 %v1938
        %v1978 = vunpack.c.l.b16 %v1939
        %v1979 = vunpack.c.l.b16 %v1940
        %v1980 = vunpack.c.l.b16 %v1941
        %v1981 = vunpack.c.l.b16 %v1942
        %v1982 = vunpack.c.l.b16 %v1943
        %v1983 = vpack.c.b16 %v1968, %v1967
        %v1984 = vpack.c.b16 %v1970, %v1969
        %v1985 = vpack.c.b16 %v1972, %v1971
        %v1986 = vpack.c.b16 %v1974, %v1973
        %v1987 = vpack.c.b16 %v1976, %v1975
        %v1988 = vpack.c.b16 %v1978, %v1977
        %v1989 = vpack.c.b16 %v1980, %v1979
        %v1990 = vpack.c.b16 %v1982, %v1981
        %1999 = vmatprep.subr.bf16.mxu0 0
        %2000 = vmatpush1.bf16.msra.mxu0 %v1983
        %2001 = vmatprep.subr.bf16.mxu0 0
        %2002 = vmatpush1.bf16.msra.mxu0 %v1984
        %2003 = vmatprep.subr.bf16.mxu0 0
        %2004 = vmatpush1.bf16.msra.mxu0 %v1985
        %2005 = vmatprep.subr.bf16.mxu0 0
        %2006 = vmatpush1.bf16.msra.mxu0 %v1986
        %2007 = vmatprep.subr.bf16.mxu0 0
        %2008 = vmatpush1.bf16.msra.mxu0 %v1987
        %2009 = vmatprep.subr.bf16.mxu0 0
        %2010 = vmatpush1.bf16.msra.mxu0 %v1988
        %2011 = vmatprep.subr.bf16.mxu0 0
        %2012 = vmatpush1.bf16.msra.mxu0 %v1989
        %2013 = vmatprep.subr.bf16.mxu0 0
        %2014 = vmatpush1.bf16.msra.mxu0 %v1990
        %2015 = vmatprep.subr.bf16.mxu0 0
        %2016 = vmatpush1.bf16.msra.mxu0 0
        %2017 = vmatprep.subr.bf16.mxu0 0
        %2018 = vmatpush1.bf16.msra.mxu0 0
        %2019 = vmatprep.subr.bf16.mxu0 0
        %2020 = vmatpush1.bf16.msra.mxu0 0
        %2021 = vmatprep.subr.bf16.mxu0 0
        %2022 = vmatpush1.bf16.msra.mxu0 0
        %2023 = vmatprep.subr.bf16.mxu0 0
        %2024 = vmatpush1.bf16.msra.mxu0 0
        %2025 = vmatprep.subr.bf16.mxu0 0
        %2026 = vmatpush1.bf16.msra.mxu0 0
        %2027 = vmatprep.subr.bf16.mxu0 0
        %2028 = vmatpush1.bf16.msra.mxu0 0
        %2029 = vmatprep.subr.bf16.mxu0 0
        %2030 = vmatpush1.bf16.msra.mxu0 0
        %2031 = vmatprep.mubr.bf16.mxu0 0
        %2032 = vmatmul.mubr.bf16.gmra.mrb[0].mxu0 %v1926
        %v2033 = vpop.f32.mrb[0].mxu0
        %v2034 = vadd.f32 %v1949, %v2033
        %v2035 = vpop.f32.mrb[0].mxu0
        %v2036 = vpop.f32.mrb[0].mxu0
        %v2037 = vadd.f32 %v1949, %v2036
        %v2038 = vpop.f32.mrb[0].mxu0
        %2039 = vmatprep.mubr.bf16.mxu0 0
        %2040 = vmatmul.mubr.bf16.gmra.mrb[0].mxu0 %v1927
        %v2041 = vpop.f32.mrb[0].mxu0
        %v2042 = vadd.f32 %v1949, %v2041
        %v2043 = vpop.f32.mrb[0].mxu0
        %v2044 = vpop.f32.mrb[0].mxu0
        %v2045 = vadd.f32 %v1949, %v2044
        %v2046 = vpop.f32.mrb[0].mxu0
        %2047 = vdwg.mxu0
        %v2048 = vxor.u32 %v2034, 2147483648
        %v2049 = vxor.u32 %v2037, 2147483648
        %v2050 = vxor.u32 %v2042, 2147483648
        %v2051 = vxor.u32 %v2045, 2147483648
        %v2052 = vmul.f32 %v2048, 1.442695
        %v2053 = vpow.pop %v2052
        %v2054 = vmul.f32 %v2049, 1.442695
        %v2055 = vpow.pop %v2054
        %v2056 = vmul.f32 %v2050, 1.442695
        %v2057 = vpow.pop %v2056
        %v2058 = vmul.f32 %v2051, 1.442695
        %v2059 = vpow.pop %v2058
        %v2060 = vadd.f32 %v2053, 1.0
        %v2061 = vadd.f32 %v2055, 1.0
        %v2062 = vadd.f32 %v2057, 1.0
        %v2063 = vadd.f32 %v2059, 1.0
        %v2064 = vrcp.pop %v2060
        %v2065 = vmul.f32 1.0, %v2064
        %v2066 = vrcp.pop %v2061
        %v2067 = vmul.f32 1.0, %v2066
        %v2068 = vrcp.pop %v2062
        %v2069 = vmul.f32 1.0, %v2068
        %v2070 = vrcp.pop %v2063
        %v2071 = vmul.f32 1.0, %v2070
        %vm2072 = vcmask 97280
        %2073 = vst.msk [vmem:[%s349] sm:$0xff] %vm2072, %v2065
        %2074 = vst.msk [vmem:[%s349 + $0x8] sm:$0xff] %vm2072, %v2067
        %2075 = vst.msk [vmem:[%s349 + $0x10] sm:$0xff] %vm2072, %v2069
        %2076 = vst.msk [vmem:[%s349 + $0x18] sm:$0xff] %vm2072, %v2071
        %s2077 = smul.u32 4, %s21
        %p2078 = scmp.lt.s32.totalorder %s2077, 7
        %s2079 = scalar_select %p2078, %s2077, 7
        %s2080 = smul.addr %s2079, 8
        %s2081 = scalar_lea.vmem %s9, %s2080
        // Predicated region
        $region61: #{tpu_custom_call.1} parent=55 // pred_check
          %p2082 = pneg %p233
        $region62: #{tpu_custom_call.1} parent=55 // pred_check_branch
          %2084 = sbr.rel (%p2082) target = $region64
        $region63: #{tpu_custom_call.1} parent=55 // pred_region
          %s2085 = smul.u32 4, %s21
        $region64: #{tpu_custom_call.1} parent=55 // pred_fallthru
          _
      $region56: #{tpu_custom_call.1} parent=5 // pred_fallthru
        _
      %p2086 = scmp.le.s32.totalorder 2, %s16
      // Predicated region
      $region65: #{tpu_custom_call.1} parent=5 // pred_check
        %p2087 = pneg %p2086
      $region66: #{tpu_custom_call.1} parent=5 // pred_check_branch
        %2089 = sbr.rel (%p2087) target = $region68
      $region67: #{tpu_custom_call.1} parent=5 // pred_region
        %s2090 = ssub.s32 %s16, 2
        // Predicated region
        $region69: #{tpu_custom_call.1} parent=67 // pred_check
          %p2091 = pneg %p239
        $region70: #{tpu_custom_call.1} parent=67 // pred_check_branch
          %2093 = sbr.rel (%p2091) target = $region72
        $region71: #{tpu_custom_call.1} parent=67 // pred_region
          %s2094 = smul.u32 4, %s22
          %p2095 = scmp.lt.s32.totalorder %s2094, 7
          %s2096 = scalar_select %p2095, %s2094, 7
          %s2097 = smul.addr %s2096, 8
          %s2098 = scalar_lea.vmem %s9, %s2097
        $region72: #{tpu_custom_call.1} parent=67 // pred_fallthru
          _
      $region68: #{tpu_custom_call.1} parent=5 // pred_fallthru
        _
    $region6: #{tpu_custom_call.1} parent=1 // loop_footer
      %s20 = sadd.s32 1, %s16
    $region7: #{tpu_custom_call.1} parent=1 // loop_footer_branch
      %15 = sbr.rel target = $region3
    $region8: #{tpu_custom_call.1} parent=1 // loop_exit
      _
    %2099 = vsyncpa [#allocation3], 1
    %s2100 = scalar_lea.sflag [#allocation3], 1
    %2101 = vsyncpa %s2100, 1

</llo_original>
